<compile_context>
chip_gen: v7x
topology: tpu7x:2x2x1
jax: 0.10.0
libtpu: 0.0.40
codegen_flags: <defaults>
</compile_context>

<pallas_src>
import functools

import numpy as np
import jax
import jax.numpy as jnp
from jax.experimental import pallas as pl
from jax.experimental.pallas import tpu as pltpu


# ----------------------------------------------------------------------------
# Fused forward kernel
# ----------------------------------------------------------------------------
def _fused_forward_kernel(
    # SMEM index vectors
    b2a_ref, b2rev_ref,
    # VMEM inputs
    f_atoms_ref, f_bonds_ref, a2b_ref, pool_ref,
    wi_ref, wh_ref, wo_ref, bias_o_ref, w1_ref, bias1_ref, w2_ref, bias2_ref,
    # output
    out_ref,
    # VMEM scratch
    msg_sc, amsg_sc, tmp_sc,
    *, depth, num_bonds, atom_fdim,
):
    f32 = jnp.float32

    # ---- MPNEncoder: input transform (W_i, bias=False), computed once ----
    inp = jnp.dot(f_bonds_ref[...], wi_ref[...], preferred_element_type=f32)   # [NB, h]
    msg_sc[...] = jnp.maximum(inp, 0.0)                                        # message_0

    # ---- depth-1 message passing steps, everything resident in VMEM ----
    def mp_step(_, carry):
        msg = msg_sc[...]                                                      # [NB, h]
        # sum of incoming bond messages per atom (dense 0/1 aggregation matrix)
        amsg_sc[...] = jnp.dot(a2b_ref[...], msg, preferred_element_type=f32)  # [NA, h]
        # per bond b:  new_m[b] = a_message[b2a[b]] - message[b2revb[b]]
        # (SMEM index gather replaces the SELB2A / REV one-hot matmuls)
        for b in range(num_bonds):                                             # static unroll
            src = b2a_ref[b]
            rev = b2rev_ref[b]
            tmp_sc[pl.ds(b, 1), :] = (
                amsg_sc[pl.ds(src, 1), :] - msg_sc[pl.ds(rev, 1), :]
            )
        msg_sc[...] = jnp.maximum(
            inp + jnp.dot(tmp_sc[...], wh_ref[...], preferred_element_type=f32), 0.0
        )
        return carry

    jax.lax.fori_loop(0, depth - 1, mp_step, 0)

    # ---- final atom aggregation + W_o (concat folded into split matmul) ----
    a_msg = jnp.dot(a2b_ref[...], msg_sc[...], preferred_element_type=f32)     # [NA, h]
    atom_h = jnp.dot(f_atoms_ref[...], wo_ref[:atom_fdim, :],
                     preferred_element_type=f32)
    atom_h = atom_h + jnp.dot(a_msg, wo_ref[atom_fdim:, :],
                              preferred_element_type=f32)
    atom_h = jnp.maximum(atom_h + bias_o_ref[...], 0.0)                        # [NA, h]

    # ---- per-molecule mean readout ----
    mol = jnp.dot(pool_ref[...], atom_h, preferred_element_type=f32)           # [NMOL, h]

    # ---- FFN (dropout = identity at inference), sigmoid for classification/eval ----
    h1 = jnp.maximum(
        jnp.dot(mol, w1_ref[...], preferred_element_type=f32) + bias1_ref[...], 0.0)
    y = jnp.dot(h1, w2_ref[...], preferred_element_type=f32) + bias2_ref[...]
    out_ref[...] = 1.0 / (1.0 + jnp.exp(-y))


# ----------------------------------------------------------------------------
# Wrapper: one pallas_call for the whole forward pass
# ----------------------------------------------------------------------------
def molecule_model_forward(params, graph, depth=3):
    b2a, b2revb, f_atoms, f_bonds, A2B, POOL = graph
    num_atoms, atom_fdim = f_atoms.shape
    num_bonds = f_bonds.shape[0]
    num_mols = POOL.shape[0]
    hidden = params["W_i_T"].shape[1]
    num_tasks = params["W2_T"].shape[1]

    kernel = functools.partial(
        _fused_forward_kernel,
        depth=depth, num_bonds=num_bonds, atom_fdim=atom_fdim,
    )

    smem = pl.BlockSpec(memory_space=pltpu.MemorySpace.SMEM)
    vmem = pl.BlockSpec(memory_space=pltpu.MemorySpace.VMEM)

    return pl.pallas_call(
        kernel,
        out_shape=jax.ShapeDtypeStruct((num_mols, num_tasks), jnp.float32),
        in_specs=[smem, smem] + [vmem] * 12,
        out_specs=vmem,
        scratch_shapes=[
            pltpu.VMEM((num_bonds, hidden), jnp.float32),   # message
            pltpu.VMEM((num_atoms, hidden), jnp.float32),   # per-atom incoming sum
            pltpu.VMEM((num_bonds, hidden), jnp.float32),   # gathered new messages
        ],
    )(
        b2a, b2revb,
        f_atoms, f_bonds, A2B, POOL,
        params["W_i_T"], params["W_h_T"],
        params["W_o_T"], params["b_o"].reshape(1, -1),
        params["W1_T"], params["b1"].reshape(1, -1),
        params["W2_T"], params["b2"].reshape(1, -1),
    )


# ----------------------------------------------------------------------------
# Pure-JAX reference (same math, no Pallas) for verification
# ----------------------------------------------------------------------------
def reference_forward(params, graph, depth=3):
    b2a, b2revb, f_atoms, f_bonds, A2B, POOL = graph
    inp = f_bonds @ params["W_i_T"]
    message = jnp.maximum(inp, 0.0)
    for _ in range(depth - 1):
        a_msg = A2B @ message
        m = a_msg[b2a] - message[b2revb]
        message = jnp.maximum(inp + m @ params["W_h_T"], 0.0)
    a_message = A2B @ message
    a_input = jnp.concatenate([f_atoms, a_message], axis=1)
    atom_hiddens = jnp.maximum(a_input @ params["W_o_T"] + params["b_o"], 0.0)
    mol_vecs = POOL @ atom_hiddens
    h = jnp.maximum(mol_vecs @ params["W1_T"] + params["b1"], 0.0)
    return jax.nn.sigmoid(h @ params["W2_T"] + params["b2"])


# ----------------------------------------------------------------------------
# Main
# ----------------------------------------------------------------------------
if __name__ == "__main__":
    # --- model sizes ---
    ATOM_FDIM = 16
    BOND_FDIM = 32
    HIDDEN = 32
    FFN_HIDDEN = 32
    NUM_TASKS = 3
    DEPTH = 3

    # --- synthetic graph: 2 molecules, 7 real atoms (pad to 8), 12 directed bonds (pad to 16)
    NA, NB, NMOL = 8, 16, 2
    undirected = [(0, 1), (1, 2), (3, 4), (4, 5), (5, 6), (6, 3)]  # mol0: atoms 0-2, mol1: 3-6
    b2a_list, b2rev_list = [], []
    a2b = [[] for _ in range(NA)]
    for i, (u, v) in enumerate(undirected):
        bf, bb = 2 * i, 2 * i + 1          # directed bonds u->v and v->u
        b2a_list += [u, v]
        a2b[v].append(bf)
        a2b[u].append(bb)
        b2rev_list += [bb, bf]
    nb_real, na_real = len(b2a_list), 7

    A2B = np.zeros((NA, NB), np.float32)       # incoming-bond aggregation (scatter-add)
    for a in range(NA):
        for b in a2b[a]:
            A2B[a, b] = 1.0
    b2a_arr = np.zeros((NB,), np.int32)
    b2rev_arr = np.zeros((NB,), np.int32)
    for b in range(NB):
        if b < nb_real:
            b2a_arr[b] = b2a_list[b]
            b2rev_arr[b] = b2rev_list[b]
        else:                                   # padded bonds point at the zero padding atom / self
            b2a_arr[b] = na_real
            b2rev_arr[b] = b
    POOL = np.zeros((NMOL, NA), np.float32)    # per-molecule mean readout
    POOL[0, 0:3] = 1.0 / 3.0
    POOL[1, 3:7] = 1.0 / 4.0

    # --- deterministic inputs & parameters ---
    key = jax.random.PRNGKey(0)
    ks = jax.random.split(key, 10)
    f_atoms = jax.random.normal(ks[0], (NA, ATOM_FDIM), jnp.float32)
    f_atoms = f_atoms.at[na_real:].set(0.0)
    f_bonds = jax.random.normal(ks[1], (NB, BOND_FDIM), jnp.float32)
    f_bonds = f_bonds.at[nb_real:].set(0.0)

    def init_w(k, in_dim, out_dim):  # xavier-ish init, stored transposed [in, out]
        scale = np.sqrt(2.0 / (in_dim + out_dim)).astype(np.float32)
        return jax.random.normal(k, (in_dim, out_dim), jnp.float32) * scale

    params = {
        "W_i_T": init_w(ks[2], BOND_FDIM, HIDDEN),              # nn.Linear(bond_fdim, h, bias=False)
        "W_h_T": init_w(ks[3], HIDDEN, HIDDEN),                 # nn.Linear(h, h, bias=False)
        "W_o_T": init_w(ks[4], ATOM_FDIM + HIDDEN, HIDDEN),     # nn.Linear(atom_fdim + h, h)
        "b_o": jax.random.normal(ks[7], (HIDDEN,), jnp.float32) * 0.1,
        "W1_T": init_w(ks[5], HIDDEN, FFN_HIDDEN),              # FFN Linear 1
        "b1": jax.random.normal(ks[8], (FFN_HIDDEN,), jnp.float32) * 0.1,
        "W2_T": init_w(ks[6], FFN_HIDDEN, NUM_TASKS),           # FFN Linear 2
        "b2": jax.random.normal(ks[9], (NUM_TASKS,), jnp.float32) * 0.1,
    }

    graph = (
        jnp.asarray(b2a_arr),
        jnp.asarray(b2rev_arr),
        f_atoms,
        f_bonds,
        jnp.asarray(A2B),
        jnp.asarray(POOL),
    )

    out = molecule_model_forward(params, graph, depth=DEPTH)
    out = jax.block_until_ready(out)

    ref = reference_forward(params, graph, depth=DEPTH)
    np.testing.assert_allclose(np.asarray(out), np.asarray(ref), rtol=1e-5, atol=1e-5)

    print("KERNEL_OK")
</pallas_src>

<mosaic_0001>
module attributes {stable_mosaic.version = 11 : i64} {
  func.func @_fused_forward_kernel(%arg0: memref<16xi32, #tpu.memory_space<smem>>, %arg1: memref<16xi32, #tpu.memory_space<smem>>, %arg2: memref<8x16xf32, #tpu.memory_space<vmem>>, %arg3: memref<16x32xf32, #tpu.memory_space<vmem>>, %arg4: memref<8x16xf32, #tpu.memory_space<vmem>>, %arg5: memref<2x8xf32, #tpu.memory_space<vmem>>, %arg6: memref<32x32xf32, #tpu.memory_space<vmem>>, %arg7: memref<32x32xf32, #tpu.memory_space<vmem>>, %arg8: memref<48x32xf32, #tpu.memory_space<vmem>>, %arg9: memref<1x32xf32, #tpu.memory_space<vmem>>, %arg10: memref<32x32xf32, #tpu.memory_space<vmem>>, %arg11: memref<1x32xf32, #tpu.memory_space<vmem>>, %arg12: memref<32x3xf32, #tpu.memory_space<vmem>>, %arg13: memref<1x3xf32, #tpu.memory_space<vmem>>, %arg14: memref<2x3xf32, #tpu.memory_space<vmem>>, %arg15: memref<16x32xf32, #tpu.memory_space<vmem>>, %arg16: memref<8x32xf32, #tpu.memory_space<vmem>>, %arg17: memref<16x32xf32, #tpu.memory_space<vmem>>) attributes {dimension_semantics = [], scalar_prefetch = 0 : i64, scratch_operands = 3 : i64, tpu.core_type = #tpu.core_type<tc>} {
    %c0 = arith.constant 0 : index
    %c0_0 = arith.constant 0 : index
    %0 = vector.load %arg3[%c0, %c0_0] : memref<16x32xf32, #tpu.memory_space<vmem>>, vector<16x32xf32>
    %c0_1 = arith.constant 0 : index
    %c0_2 = arith.constant 0 : index
    %1 = vector.load %arg6[%c0_1, %c0_2] : memref<32x32xf32, #tpu.memory_space<vmem>>, vector<32x32xf32>
    %cst = arith.constant dense<0.000000e+00> : vector<16x32xf32>
    %2 = tpu.matmul %0, %1, %cst {dimension_numbers = #tpu.dot_dimension_numbers<[1], [0], [0], [1], [0, 0, 1, 1], [], []>} : vector<16x32xf32>, vector<32x32xf32>, vector<16x32xf32> -> vector<16x32xf32>
    %cst_3 = arith.constant 0.000000e+00 : f32
    %3 = vector.broadcast %cst_3 : f32 to vector<16x32xf32>
    %4 = arith.maximumf %2, %3 : vector<16x32xf32>
    %c0_4 = arith.constant 0 : index
    %c0_5 = arith.constant 0 : index
    %5 = vector.load %arg15[%c0_4, %c0_5] : memref<16x32xf32, #tpu.memory_space<vmem>>, vector<16x32xf32>
    tpu.vector_store %arg15[%c0_4, %c0_5], %4 {strides = array<i32>} : memref<16x32xf32, #tpu.memory_space<vmem>>, vector<16x32xf32>,
    %c0_i32 = arith.constant 0 : i32
    %c2_i32 = arith.constant 2 : i32
    %6 = arith.addi %c0_i32, %c2_i32 : i32
    %c1_i32 = arith.constant 1 : i32
    scf.for %arg18 = %c0_i32 to %6 step %c1_i32  : i32 {
      %c0_40 = arith.constant 0 : index
      %c0_41 = arith.constant 0 : index
      %43 = vector.load %arg15[%c0_40, %c0_41] : memref<16x32xf32, #tpu.memory_space<vmem>>, vector<16x32xf32>
      %c0_42 = arith.constant 0 : index
      %c0_43 = arith.constant 0 : index
      %44 = vector.load %arg4[%c0_42, %c0_43] : memref<8x16xf32, #tpu.memory_space<vmem>>, vector<8x16xf32>
      %cst_44 = arith.constant dense<0.000000e+00> : vector<8x32xf32>
      %45 = tpu.matmul %44, %43, %cst_44 {dimension_numbers = #tpu.dot_dimension_numbers<[1], [0], [0], [1], [0, 0, 1, 1], [], []>} : vector<8x16xf32>, vector<16x32xf32>, vector<8x32xf32> -> vector<8x32xf32>
      %c0_45 = arith.constant 0 : index
      %c0_46 = arith.constant 0 : index
      %46 = vector.load %arg16[%c0_45, %c0_46] : memref<8x32xf32, #tpu.memory_space<vmem>>, vector<8x32xf32>
      tpu.vector_store %arg16[%c0_45, %c0_46], %45 {strides = array<i32>} : memref<8x32xf32, #tpu.memory_space<vmem>>, vector<8x32xf32>,
      %c0_47 = arith.constant 0 : index
      %47 = memref.load %arg0[%c0_47] : memref<16xi32, #tpu.memory_space<smem>>
      %c0_48 = arith.constant 0 : index
      %48 = memref.load %arg1[%c0_48] : memref<16xi32, #tpu.memory_space<smem>>
      %49 = arith.index_cast %47 : i32 to index
      %c0_49 = arith.constant 0 : index
      %50 = vector.load %arg16[%49, %c0_49] : memref<8x32xf32, #tpu.memory_space<vmem>>, vector<1x32xf32>
      %51 = arith.index_cast %48 : i32 to index
      %c0_50 = arith.constant 0 : index
      %52 = vector.load %arg15[%51, %c0_50] : memref<16x32xf32, #tpu.memory_space<vmem>>, vector<1x32xf32>
      %53 = arith.subf %50, %52 : vector<1x32xf32>
      %c0_51 = arith.constant 0 : index
      %c0_52 = arith.constant 0 : index
      %54 = vector.load %arg17[%c0_51, %c0_52] : memref<16x32xf32, #tpu.memory_space<vmem>>, vector<1x32xf32>
      tpu.vector_store %arg17[%c0_51, %c0_52], %53 {strides = array<i32>} : memref<16x32xf32, #tpu.memory_space<vmem>>, vector<1x32xf32>,
      %c1 = arith.constant 1 : index
      %55 = memref.load %arg0[%c1] : memref<16xi32, #tpu.memory_space<smem>>
      %c1_53 = arith.constant 1 : index
      %56 = memref.load %arg1[%c1_53] : memref<16xi32, #tpu.memory_space<smem>>
      %57 = arith.index_cast %55 : i32 to index
      %c0_54 = arith.constant 0 : index
      %58 = vector.load %arg16[%57, %c0_54] : memref<8x32xf32, #tpu.memory_space<vmem>>, vector<1x32xf32>
      %59 = arith.index_cast %56 : i32 to index
      %c0_55 = arith.constant 0 : index
      %60 = vector.load %arg15[%59, %c0_55] : memref<16x32xf32, #tpu.memory_space<vmem>>, vector<1x32xf32>
      %61 = arith.subf %58, %60 : vector<1x32xf32>
      %c1_56 = arith.constant 1 : index
      %c0_57 = arith.constant 0 : index
      %62 = vector.load %arg17[%c1_56, %c0_57] : memref<16x32xf32, #tpu.memory_space<vmem>>, vector<1x32xf32>
      tpu.vector_store %arg17[%c1_56, %c0_57], %61 {strides = array<i32>} : memref<16x32xf32, #tpu.memory_space<vmem>>, vector<1x32xf32>,
      %c2 = arith.constant 2 : index
      %63 = memref.load %arg0[%c2] : memref<16xi32, #tpu.memory_space<smem>>
      %c2_58 = arith.constant 2 : index
      %64 = memref.load %arg1[%c2_58] : memref<16xi32, #tpu.memory_space<smem>>
      %65 = arith.index_cast %63 : i32 to index
      %c0_59 = arith.constant 0 : index
      %66 = vector.load %arg16[%65, %c0_59] : memref<8x32xf32, #tpu.memory_space<vmem>>, vector<1x32xf32>
      %67 = arith.index_cast %64 : i32 to index
      %c0_60 = arith.constant 0 : index
      %68 = vector.load %arg15[%67, %c0_60] : memref<16x32xf32, #tpu.memory_space<vmem>>, vector<1x32xf32>
      %69 = arith.subf %66, %68 : vector<1x32xf32>
      %c2_61 = arith.constant 2 : index
      %c0_62 = arith.constant 0 : index
      %70 = vector.load %arg17[%c2_61, %c0_62] : memref<16x32xf32, #tpu.memory_space<vmem>>, vector<1x32xf32>
      tpu.vector_store %arg17[%c2_61, %c0_62], %69 {strides = array<i32>} : memref<16x32xf32, #tpu.memory_space<vmem>>, vector<1x32xf32>,
      %c3 = arith.constant 3 : index
      %71 = memref.load %arg0[%c3] : memref<16xi32, #tpu.memory_space<smem>>
      %c3_63 = arith.constant 3 : index
      %72 = memref.load %arg1[%c3_63] : memref<16xi32, #tpu.memory_space<smem>>
      %73 = arith.index_cast %71 : i32 to index
      %c0_64 = arith.constant 0 : index
      %74 = vector.load %arg16[%73, %c0_64] : memref<8x32xf32, #tpu.memory_space<vmem>>, vector<1x32xf32>
      %75 = arith.index_cast %72 : i32 to index
      %c0_65 = arith.constant 0 : index
      %76 = vector.load %arg15[%75, %c0_65] : memref<16x32xf32, #tpu.memory_space<vmem>>, vector<1x32xf32>
      %77 = arith.subf %74, %76 : vector<1x32xf32>
      %c3_66 = arith.constant 3 : index
      %c0_67 = arith.constant 0 : index
      %78 = vector.load %arg17[%c3_66, %c0_67] : memref<16x32xf32, #tpu.memory_space<vmem>>, vector<1x32xf32>
      tpu.vector_store %arg17[%c3_66, %c0_67], %77 {strides = array<i32>} : memref<16x32xf32, #tpu.memory_space<vmem>>, vector<1x32xf32>,
      %c4 = arith.constant 4 : index
      %79 = memref.load %arg0[%c4] : memref<16xi32, #tpu.memory_space<smem>>
      %c4_68 = arith.constant 4 : index
      %80 = memref.load %arg1[%c4_68] : memref<16xi32, #tpu.memory_space<smem>>
      %81 = arith.index_cast %79 : i32 to index
      %c0_69 = arith.constant 0 : index
      %82 = vector.load %arg16[%81, %c0_69] : memref<8x32xf32, #tpu.memory_space<vmem>>, vector<1x32xf32>
      %83 = arith.index_cast %80 : i32 to index
      %c0_70 = arith.constant 0 : index
      %84 = vector.load %arg15[%83, %c0_70] : memref<16x32xf32, #tpu.memory_space<vmem>>, vector<1x32xf32>
      %85 = arith.subf %82, %84 : vector<1x32xf32>
      %c4_71 = arith.constant 4 : index
      %c0_72 = arith.constant 0 : index
      %86 = vector.load %arg17[%c4_71, %c0_72] : memref<16x32xf32, #tpu.memory_space<vmem>>, vector<1x32xf32>
      tpu.vector_store %arg17[%c4_71, %c0_72], %85 {strides = array<i32>} : memref<16x32xf32, #tpu.memory_space<vmem>>, vector<1x32xf32>,
      %c5 = arith.constant 5 : index
      %87 = memref.load %arg0[%c5] : memref<16xi32, #tpu.memory_space<smem>>
      %c5_73 = arith.constant 5 : index
      %88 = memref.load %arg1[%c5_73] : memref<16xi32, #tpu.memory_space<smem>>
      %89 = arith.index_cast %87 : i32 to index
      %c0_74 = arith.constant 0 : index
      %90 = vector.load %arg16[%89, %c0_74] : memref<8x32xf32, #tpu.memory_space<vmem>>, vector<1x32xf32>
      %91 = arith.index_cast %88 : i32 to index
      %c0_75 = arith.constant 0 : index
      %92 = vector.load %arg15[%91, %c0_75] : memref<16x32xf32, #tpu.memory_space<vmem>>, vector<1x32xf32>
      %93 = arith.subf %90, %92 : vector<1x32xf32>
      %c5_76 = arith.constant 5 : index
      %c0_77 = arith.constant 0 : index
      %94 = vector.load %arg17[%c5_76, %c0_77] : memref<16x32xf32, #tpu.memory_space<vmem>>, vector<1x32xf32>
      tpu.vector_store %arg17[%c5_76, %c0_77], %93 {strides = array<i32>} : memref<16x32xf32, #tpu.memory_space<vmem>>, vector<1x32xf32>,
      %c6 = arith.constant 6 : index
      %95 = memref.load %arg0[%c6] : memref<16xi32, #tpu.memory_space<smem>>
      %c6_78 = arith.constant 6 : index
      %96 = memref.load %arg1[%c6_78] : memref<16xi32, #tpu.memory_space<smem>>
      %97 = arith.index_cast %95 : i32 to index
      %c0_79 = arith.constant 0 : index
      %98 = vector.load %arg16[%97, %c0_79] : memref<8x32xf32, #tpu.memory_space<vmem>>, vector<1x32xf32>
      %99 = arith.index_cast %96 : i32 to index
      %c0_80 = arith.constant 0 : index
      %100 = vector.load %arg15[%99, %c0_80] : memref<16x32xf32, #tpu.memory_space<vmem>>, vector<1x32xf32>
      %101 = arith.subf %98, %100 : vector<1x32xf32>
      %c6_81 = arith.constant 6 : index
      %c0_82 = arith.constant 0 : index
      %102 = vector.load %arg17[%c6_81, %c0_82] : memref<16x32xf32, #tpu.memory_space<vmem>>, vector<1x32xf32>
      tpu.vector_store %arg17[%c6_81, %c0_82], %101 {strides = array<i32>} : memref<16x32xf32, #tpu.memory_space<vmem>>, vector<1x32xf32>,
      %c7 = arith.constant 7 : index
      %103 = memref.load %arg0[%c7] : memref<16xi32, #tpu.memory_space<smem>>
      %c7_83 = arith.constant 7 : index
      %104 = memref.load %arg1[%c7_83] : memref<16xi32, #tpu.memory_space<smem>>
      %105 = arith.index_cast %103 : i32 to index
      %c0_84 = arith.constant 0 : index
      %106 = vector.load %arg16[%105, %c0_84] : memref<8x32xf32, #tpu.memory_space<vmem>>, vector<1x32xf32>
      %107 = arith.index_cast %104 : i32 to index
      %c0_85 = arith.constant 0 : index
      %108 = vector.load %arg15[%107, %c0_85] : memref<16x32xf32, #tpu.memory_space<vmem>>, vector<1x32xf32>
      %109 = arith.subf %106, %108 : vector<1x32xf32>
      %c7_86 = arith.constant 7 : index
      %c0_87 = arith.constant 0 : index
      %110 = vector.load %arg17[%c7_86, %c0_87] : memref<16x32xf32, #tpu.memory_space<vmem>>, vector<1x32xf32>
      tpu.vector_store %arg17[%c7_86, %c0_87], %109 {strides = array<i32>} : memref<16x32xf32, #tpu.memory_space<vmem>>, vector<1x32xf32>,
      %c8 = arith.constant 8 : index
      %111 = memref.load %arg0[%c8] : memref<16xi32, #tpu.memory_space<smem>>
      %c8_88 = arith.constant 8 : index
      %112 = memref.load %arg1[%c8_88] : memref<16xi32, #tpu.memory_space<smem>>
      %113 = arith.index_cast %111 : i32 to index
      %c0_89 = arith.constant 0 : index
      %114 = vector.load %arg16[%113, %c0_89] : memref<8x32xf32, #tpu.memory_space<vmem>>, vector<1x32xf32>
      %115 = arith.index_cast %112 : i32 to index
      %c0_90 = arith.constant 0 : index
      %116 = vector.load %arg15[%115, %c0_90] : memref<16x32xf32, #tpu.memory_space<vmem>>, vector<1x32xf32>
      %117 = arith.subf %114, %116 : vector<1x32xf32>
      %c8_91 = arith.constant 8 : index
      %c0_92 = arith.constant 0 : index
      %118 = vector.load %arg17[%c8_91, %c0_92] : memref<16x32xf32, #tpu.memory_space<vmem>>, vector<1x32xf32>
      tpu.vector_store %arg17[%c8_91, %c0_92], %117 {strides = array<i32>} : memref<16x32xf32, #tpu.memory_space<vmem>>, vector<1x32xf32>,
      %c9 = arith.constant 9 : index
      %119 = memref.load %arg0[%c9] : memref<16xi32, #tpu.memory_space<smem>>
      %c9_93 = arith.constant 9 : index
      %120 = memref.load %arg1[%c9_93] : memref<16xi32, #tpu.memory_space<smem>>
      %121 = arith.index_cast %119 : i32 to index
      %c0_94 = arith.constant 0 : index
      %122 = vector.load %arg16[%121, %c0_94] : memref<8x32xf32, #tpu.memory_space<vmem>>, vector<1x32xf32>
      %123 = arith.index_cast %120 : i32 to index
      %c0_95 = arith.constant 0 : index
      %124 = vector.load %arg15[%123, %c0_95] : memref<16x32xf32, #tpu.memory_space<vmem>>, vector<1x32xf32>
      %125 = arith.subf %122, %124 : vector<1x32xf32>
      %c9_96 = arith.constant 9 : index
      %c0_97 = arith.constant 0 : index
      %126 = vector.load %arg17[%c9_96, %c0_97] : memref<16x32xf32, #tpu.memory_space<vmem>>, vector<1x32xf32>
      tpu.vector_store %arg17[%c9_96, %c0_97], %125 {strides = array<i32>} : memref<16x32xf32, #tpu.memory_space<vmem>>, vector<1x32xf32>,
      %c10 = arith.constant 10 : index
      %127 = memref.load %arg0[%c10] : memref<16xi32, #tpu.memory_space<smem>>
      %c10_98 = arith.constant 10 : index
      %128 = memref.load %arg1[%c10_98] : memref<16xi32, #tpu.memory_space<smem>>
      %129 = arith.index_cast %127 : i32 to index
      %c0_99 = arith.constant 0 : index
      %130 = vector.load %arg16[%129, %c0_99] : memref<8x32xf32, #tpu.memory_space<vmem>>, vector<1x32xf32>
      %131 = arith.index_cast %128 : i32 to index
      %c0_100 = arith.constant 0 : index
      %132 = vector.load %arg15[%131, %c0_100] : memref<16x32xf32, #tpu.memory_space<vmem>>, vector<1x32xf32>
      %133 = arith.subf %130, %132 : vector<1x32xf32>
      %c10_101 = arith.constant 10 : index
      %c0_102 = arith.constant 0 : index
      %134 = vector.load %arg17[%c10_101, %c0_102] : memref<16x32xf32, #tpu.memory_space<vmem>>, vector<1x32xf32>
      tpu.vector_store %arg17[%c10_101, %c0_102], %133 {strides = array<i32>} : memref<16x32xf32, #tpu.memory_space<vmem>>, vector<1x32xf32>,
      %c11 = arith.constant 11 : index
      %135 = memref.load %arg0[%c11] : memref<16xi32, #tpu.memory_space<smem>>
      %c11_103 = arith.constant 11 : index
      %136 = memref.load %arg1[%c11_103] : memref<16xi32, #tpu.memory_space<smem>>
      %137 = arith.index_cast %135 : i32 to index
      %c0_104 = arith.constant 0 : index
      %138 = vector.load %arg16[%137, %c0_104] : memref<8x32xf32, #tpu.memory_space<vmem>>, vector<1x32xf32>
      %139 = arith.index_cast %136 : i32 to index
      %c0_105 = arith.constant 0 : index
      %140 = vector.load %arg15[%139, %c0_105] : memref<16x32xf32, #tpu.memory_space<vmem>>, vector<1x32xf32>
      %141 = arith.subf %138, %140 : vector<1x32xf32>
      %c11_106 = arith.constant 11 : index
      %c0_107 = arith.constant 0 : index
      %142 = vector.load %arg17[%c11_106, %c0_107] : memref<16x32xf32, #tpu.memory_space<vmem>>, vector<1x32xf32>
      tpu.vector_store %arg17[%c11_106, %c0_107], %141 {strides = array<i32>} : memref<16x32xf32, #tpu.memory_space<vmem>>, vector<1x32xf32>,
      %c12 = arith.constant 12 : index
      %143 = memref.load %arg0[%c12] : memref<16xi32, #tpu.memory_space<smem>>
      %c12_108 = arith.constant 12 : index
      %144 = memref.load %arg1[%c12_108] : memref<16xi32, #tpu.memory_space<smem>>
      %145 = arith.index_cast %143 : i32 to index
      %c0_109 = arith.constant 0 : index
      %146 = vector.load %arg16[%145, %c0_109] : memref<8x32xf32, #tpu.memory_space<vmem>>, vector<1x32xf32>
      %147 = arith.index_cast %144 : i32 to index
      %c0_110 = arith.constant 0 : index
      %148 = vector.load %arg15[%147, %c0_110] : memref<16x32xf32, #tpu.memory_space<vmem>>, vector<1x32xf32>
      %149 = arith.subf %146, %148 : vector<1x32xf32>
      %c12_111 = arith.constant 12 : index
      %c0_112 = arith.constant 0 : index
      %150 = vector.load %arg17[%c12_111, %c0_112] : memref<16x32xf32, #tpu.memory_space<vmem>>, vector<1x32xf32>
      tpu.vector_store %arg17[%c12_111, %c0_112], %149 {strides = array<i32>} : memref<16x32xf32, #tpu.memory_space<vmem>>, vector<1x32xf32>,
      %c13 = arith.constant 13 : index
      %151 = memref.load %arg0[%c13] : memref<16xi32, #tpu.memory_space<smem>>
      %c13_113 = arith.constant 13 : index
      %152 = memref.load %arg1[%c13_113] : memref<16xi32, #tpu.memory_space<smem>>
      %153 = arith.index_cast %151 : i32 to index
      %c0_114 = arith.constant 0 : index
      %154 = vector.load %arg16[%153, %c0_114] : memref<8x32xf32, #tpu.memory_space<vmem>>, vector<1x32xf32>
      %155 = arith.index_cast %152 : i32 to index
      %c0_115 = arith.constant 0 : index
      %156 = vector.load %arg15[%155, %c0_115] : memref<16x32xf32, #tpu.memory_space<vmem>>, vector<1x32xf32>
      %157 = arith.subf %154, %156 : vector<1x32xf32>
      %c13_116 = arith.constant 13 : index
      %c0_117 = arith.constant 0 : index
      %158 = vector.load %arg17[%c13_116, %c0_117] : memref<16x32xf32, #tpu.memory_space<vmem>>, vector<1x32xf32>
      tpu.vector_store %arg17[%c13_116, %c0_117], %157 {strides = array<i32>} : memref<16x32xf32, #tpu.memory_space<vmem>>, vector<1x32xf32>,
      %c14 = arith.constant 14 : index
      %159 = memref.load %arg0[%c14] : memref<16xi32, #tpu.memory_space<smem>>
      %c14_118 = arith.constant 14 : index
      %160 = memref.load %arg1[%c14_118] : memref<16xi32, #tpu.memory_space<smem>>
      %161 = arith.index_cast %159 : i32 to index
      %c0_119 = arith.constant 0 : index
      %162 = vector.load %arg16[%161, %c0_119] : memref<8x32xf32, #tpu.memory_space<vmem>>, vector<1x32xf32>
      %163 = arith.index_cast %160 : i32 to index
      %c0_120 = arith.constant 0 : index
      %164 = vector.load %arg15[%163, %c0_120] : memref<16x32xf32, #tpu.memory_space<vmem>>, vector<1x32xf32>
      %165 = arith.subf %162, %164 : vector<1x32xf32>
      %c14_121 = arith.constant 14 : index
      %c0_122 = arith.constant 0 : index
      %166 = vector.load %arg17[%c14_121, %c0_122] : memref<16x32xf32, #tpu.memory_space<vmem>>, vector<1x32xf32>
      tpu.vector_store %arg17[%c14_121, %c0_122], %165 {strides = array<i32>} : memref<16x32xf32, #tpu.memory_space<vmem>>, vector<1x32xf32>,
      %c15 = arith.constant 15 : index
      %167 = memref.load %arg0[%c15] : memref<16xi32, #tpu.memory_space<smem>>
      %c15_123 = arith.constant 15 : index
      %168 = memref.load %arg1[%c15_123] : memref<16xi32, #tpu.memory_space<smem>>
      %169 = arith.index_cast %167 : i32 to index
      %c0_124 = arith.constant 0 : index
      %170 = vector.load %arg16[%169, %c0_124] : memref<8x32xf32, #tpu.memory_space<vmem>>, vector<1x32xf32>
      %171 = arith.index_cast %168 : i32 to index
      %c0_125 = arith.constant 0 : index
      %172 = vector.load %arg15[%171, %c0_125] : memref<16x32xf32, #tpu.memory_space<vmem>>, vector<1x32xf32>
      %173 = arith.subf %170, %172 : vector<1x32xf32>
      %c15_126 = arith.constant 15 : index
      %c0_127 = arith.constant 0 : index
      %174 = vector.load %arg17[%c15_126, %c0_127] : memref<16x32xf32, #tpu.memory_space<vmem>>, vector<1x32xf32>
      tpu.vector_store %arg17[%c15_126, %c0_127], %173 {strides = array<i32>} : memref<16x32xf32, #tpu.memory_space<vmem>>, vector<1x32xf32>,
      %c0_128 = arith.constant 0 : index
      %c0_129 = arith.constant 0 : index
      %175 = vector.load %arg17[%c0_128, %c0_129] : memref<16x32xf32, #tpu.memory_space<vmem>>, vector<16x32xf32>
      %c0_130 = arith.constant 0 : index
      %c0_131 = arith.constant 0 : index
      %176 = vector.load %arg7[%c0_130, %c0_131] : memref<32x32xf32, #tpu.memory_space<vmem>>, vector<32x32xf32>
      %cst_132 = arith.constant dense<0.000000e+00> : vector<16x32xf32>
      %177 = tpu.matmul %175, %176, %cst_132 {dimension_numbers = #tpu.dot_dimension_numbers<[1], [0], [0], [1], [0, 0, 1, 1], [], []>} : vector<16x32xf32>, vector<32x32xf32>, vector<16x32xf32> -> vector<16x32xf32>
      %178 = arith.addf %2, %177 : vector<16x32xf32>
      %cst_133 = arith.constant 0.000000e+00 : f32
      %179 = vector.broadcast %cst_133 : f32 to vector<16x32xf32>
      %180 = arith.maximumf %178, %179 : vector<16x32xf32>
      %c0_134 = arith.constant 0 : index
      %c0_135 = arith.constant 0 : index
      %181 = vector.load %arg15[%c0_134, %c0_135] : memref<16x32xf32, #tpu.memory_space<vmem>>, vector<16x32xf32>
      tpu.vector_store %arg15[%c0_134, %c0_135], %180 {strides = array<i32>} : memref<16x32xf32, #tpu.memory_space<vmem>>, vector<16x32xf32>,
    }
    %c0_6 = arith.constant 0 : index
    %c0_7 = arith.constant 0 : index
    %7 = vector.load %arg4[%c0_6, %c0_7] : memref<8x16xf32, #tpu.memory_space<vmem>>, vector<8x16xf32>
    %c0_8 = arith.constant 0 : index
    %c0_9 = arith.constant 0 : index
    %8 = vector.load %arg15[%c0_8, %c0_9] : memref<16x32xf32, #tpu.memory_space<vmem>>, vector<16x32xf32>
    %cst_10 = arith.constant dense<0.000000e+00> : vector<8x32xf32>
    %9 = tpu.matmul %7, %8, %cst_10 {dimension_numbers = #tpu.dot_dimension_numbers<[1], [0], [0], [1], [0, 0, 1, 1], [], []>} : vector<8x16xf32>, vector<16x32xf32>, vector<8x32xf32> -> vector<8x32xf32>
    %c0_11 = arith.constant 0 : index
    %c0_12 = arith.constant 0 : index
    %10 = vector.load %arg2[%c0_11, %c0_12] : memref<8x16xf32, #tpu.memory_space<vmem>>, vector<8x16xf32>
    %c0_13 = arith.constant 0 : index
    %c0_14 = arith.constant 0 : index
    %11 = vector.load %arg8[%c0_13, %c0_14] : memref<48x32xf32, #tpu.memory_space<vmem>>, vector<16x32xf32>
    %cst_15 = arith.constant dense<0.000000e+00> : vector<8x32xf32>
    %12 = tpu.matmul %10, %11, %cst_15 {dimension_numbers = #tpu.dot_dimension_numbers<[1], [0], [0], [1], [0, 0, 1, 1], [], []>} : vector<8x16xf32>, vector<16x32xf32>, vector<8x32xf32> -> vector<8x32xf32>
    %c16 = arith.constant 16 : index
    %c0_16 = arith.constant 0 : index
    %13 = vector.load %arg8[%c16, %c0_16] : memref<48x32xf32, #tpu.memory_space<vmem>>, vector<32x32xf32>
    %cst_17 = arith.constant dense<0.000000e+00> : vector<8x32xf32>
    %14 = tpu.matmul %9, %13, %cst_17 {dimension_numbers = #tpu.dot_dimension_numbers<[1], [0], [0], [1], [0, 0, 1, 1], [], []>} : vector<8x32xf32>, vector<32x32xf32>, vector<8x32xf32> -> vector<8x32xf32>
    %15 = arith.addf %12, %14 : vector<8x32xf32>
    %c0_18 = arith.constant 0 : index
    %c0_19 = arith.constant 0 : index
    %16 = vector.load %arg9[%c0_18, %c0_19] : memref<1x32xf32, #tpu.memory_space<vmem>>, vector<1x32xf32>
    %17 = vector.broadcast %16 : vector<1x32xf32> to vector<8x32xf32>
    %18 = arith.addf %15, %17 : vector<8x32xf32>
    %cst_20 = arith.constant 0.000000e+00 : f32
    %19 = vector.broadcast %cst_20 : f32 to vector<8x32xf32>
    %20 = arith.maximumf %18, %19 : vector<8x32xf32>
    %c0_21 = arith.constant 0 : index
    %c0_22 = arith.constant 0 : index
    %21 = vector.load %arg5[%c0_21, %c0_22] : memref<2x8xf32, #tpu.memory_space<vmem>>, vector<2x8xf32>
    %cst_23 = arith.constant dense<0.000000e+00> : vector<2x32xf32>
    %22 = tpu.matmul %21, %20, %cst_23 {dimension_numbers = #tpu.dot_dimension_numbers<[1], [0], [0], [1], [0, 0, 1, 1], [], []>} : vector<2x8xf32>, vector<8x32xf32>, vector<2x32xf32> -> vector<2x32xf32>
    %c0_24 = arith.constant 0 : index
    %c0_25 = arith.constant 0 : index
    %23 = vector.load %arg10[%c0_24, %c0_25] : memref<32x32xf32, #tpu.memory_space<vmem>>, vector<32x32xf32>
    %cst_26 = arith.constant dense<0.000000e+00> : vector<2x32xf32>
    %24 = tpu.matmul %22, %23, %cst_26 {dimension_numbers = #tpu.dot_dimension_numbers<[1], [0], [0], [1], [0, 0, 1, 1], [], []>} : vector<2x32xf32>, vector<32x32xf32>, vector<2x32xf32> -> vector<2x32xf32>
    %c0_27 = arith.constant 0 : index
    %c0_28 = arith.constant 0 : index
    %25 = vector.load %arg11[%c0_27, %c0_28] : memref<1x32xf32, #tpu.memory_space<vmem>>, vector<1x32xf32>
    %26 = vector.broadcast %25 : vector<1x32xf32> to vector<2x32xf32>
    %27 = arith.addf %24, %26 : vector<2x32xf32>
    %cst_29 = arith.constant 0.000000e+00 : f32
    %28 = vector.broadcast %cst_29 : f32 to vector<2x32xf32>
    %29 = arith.maximumf %27, %28 : vector<2x32xf32>
    %c0_30 = arith.constant 0 : index
    %c0_31 = arith.constant 0 : index
    %30 = vector.load %arg12[%c0_30, %c0_31] : memref<32x3xf32, #tpu.memory_space<vmem>>, vector<32x3xf32>
    %cst_32 = arith.constant dense<0.000000e+00> : vector<2x3xf32>
    %31 = tpu.matmul %29, %30, %cst_32 {dimension_numbers = #tpu.dot_dimension_numbers<[1], [0], [0], [1], [0, 0, 1, 1], [], []>} : vector<2x32xf32>, vector<32x3xf32>, vector<2x3xf32> -> vector<2x3xf32>
    %c0_33 = arith.constant 0 : index
    %c0_34 = arith.constant 0 : index
    %32 = vector.load %arg13[%c0_33, %c0_34] : memref<1x3xf32, #tpu.memory_space<vmem>>, vector<1x3xf32>
    %33 = vector.broadcast %32 : vector<1x3xf32> to vector<2x3xf32>
    %34 = arith.addf %31, %33 : vector<2x3xf32>
    %cst_35 = arith.constant 0.000000e+00 : f32
    %35 = vector.broadcast %cst_35 : f32 to vector<2x3xf32>
    %36 = arith.subf %35, %34 : vector<2x3xf32>
    %37 = math.exp %36 : vector<2x3xf32>
    %cst_36 = arith.constant 1.000000e+00 : f32
    %38 = vector.broadcast %cst_36 : f32 to vector<2x3xf32>
    %39 = arith.addf %38, %37 : vector<2x3xf32>
    %cst_37 = arith.constant 1.000000e+00 : f32
    %40 = vector.broadcast %cst_37 : f32 to vector<2x3xf32>
    %41 = arith.divf %40, %39 : vector<2x3xf32>
    %c0_38 = arith.constant 0 : index
    %c0_39 = arith.constant 0 : index
    %42 = vector.load %arg14[%c0_38, %c0_39] : memref<2x3xf32, #tpu.memory_space<vmem>>, vector<2x3xf32>
    tpu.vector_store %arg14[%c0_38, %c0_39], %41 {strides = array<i32>} : memref<2x3xf32, #tpu.memory_space<vmem>>, vector<2x3xf32>,
    return
  }
}

</mosaic_0001>

<llo_original>
// kernel: tpu_custom_call.1
$region0: #{tpu_custom_call.1}
  #allocation0 [shape = 'u32[]', space=smem, size = 0x4, offset = 0x4, fixed_abs, tag = 'smem constant byte address 0x4 - core index']
  #allocation1 [shape = 'u32[144,128]{1,0:T(1,128)}', space=vmem, size = 0x12000, scoped, tag = 'internal scratch']
  #allocation2 [shape = 'f32[16,32]{1,0:T(8,128)}', space=vmem, size = 0x2000, scoped, tag = 'scratch operand']
  #allocation3 [shape = 'f32[8,32]{1,0:T(8,128)}', space=vmem, size = 0x1000, scoped, tag = 'scratch operand']
  #allocation4 [shape = 'f32[16,32]{1,0:T(8,128)}', space=vmem, size = 0x2000, scoped, tag = 'scratch operand']
  %s0 = inlined_call_operand.vmem [shape: s32[16], index: 0, kind: input, shape index: {}]
  %s1 = inlined_call_operand.vmem [shape: s32[16], index: 1, kind: input, shape index: {}]
  %s2 = inlined_call_operand.vmem [shape: f32[8,16], index: 2, kind: input, shape index: {}]
  %s3 = inlined_call_operand.hbm [shape: f32[16,32], index: 3, kind: input, shape index: {}]
  %s4 = inlined_call_operand.hbm [shape: f32[8,16], index: 4, kind: input, shape index: {}]
  %s5 = inlined_call_operand.vmem [shape: f32[2,8], index: 5, kind: input, shape index: {}]
  %s6 = inlined_call_operand.vmem [shape: f32[32,32], index: 6, kind: input, shape index: {}]
  %s7 = inlined_call_operand.vmem [shape: f32[32,32], index: 7, kind: input, shape index: {}]
  %s8 = inlined_call_operand.vmem [shape: f32[48,32], index: 8, kind: input, shape index: {}]
  %s9 = inlined_call_operand.vmem [shape: f32[1,32], index: 9, kind: input, shape index: {}]
  %s10 = inlined_call_operand.vmem [shape: f32[32,32], index: 10, kind: input, shape index: {}]
  %s11 = inlined_call_operand.vmem [shape: f32[1,32], index: 11, kind: input, shape index: {}]
  %s12 = inlined_call_operand.vmem [shape: f32[32,3], index: 12, kind: input, shape index: {}]
  %s13 = inlined_call_operand.vmem [shape: f32[1,3], index: 13, kind: input, shape index: {}]
  %s14 = inlined_call_operand.hbm [shape: f32[2,3], index: 14, kind: output, shape index: {}]
  %s15 = sld [smem:[#allocation0]]
  $region89: #{tpu_custom_call.1} parent=0
    _
  %s17 = ssub.s32 1, %s15
  %s18 = scalar_select 0, %s17, %s15
  $region1: #{tpu_custom_call.1} parent=0
    #allocation5 [shape = 'u8[512]{0}', space=smem, size = 0x200, scoped, tag = 'input window, operand 0, single buffered']
    #allocation6 [shape = 's32[1]{0}', space=sflag, size = 0x4, scoped, tag = 'scoped memory for tpu_custom_call.1']
    #allocation7 [shape = 's32[1]{0}', space=sflag, size = 0x4, scoped, tag = 'scoped memory for tpu_custom_call.1']
    #allocation8 [shape = 's32[1]{0}', space=sflag, size = 0x4, scoped, tag = 'scoped memory for tpu_custom_call.1']
    #allocation9 [shape = 'u8[512]{0}', space=smem, size = 0x200, scoped, tag = 'input window, operand 1, single buffered']
    #allocation10 [shape = 's32[1]{0}', space=sflag, size = 0x4, scoped, tag = 'scoped memory for tpu_custom_call.1']
    #allocation11 [shape = 'u8[8192]{0}', space=vmem, size = 0x2000, scoped, tag = 'input window, operand 3, single buffered']
    #allocation12 [shape = 'u8[4096]{0}', space=vmem, size = 0x1000, scoped, tag = 'input window, operand 4, single buffered']
    #allocation13 [shape = 's32[1]{0}', space=sflag, size = 0x4, scoped, tag = 'scoped memory for tpu_custom_call.1']
    #allocation14 [shape = 'u8[1024]{0}', space=vmem, size = 0x400, scoped, tag = 'output window, operand 0, single buffered']
    %19 = vsyncpa [#allocation8], 0
    %20 = vsyncpa [#allocation10], 0
    %21 = vsyncpa [#allocation6], 0
    %22 = vsyncpa [#allocation13], 0
    %23 = vsyncpa [#allocation7], 0
    // Predicated region
    $region2: #{tpu_custom_call.1} parent=1 // pred_check
      _
    $region3: #{tpu_custom_call.1} parent=1 // pred_check_branch
      %25 = sbr.rel (0) target = $region5
    $region4: #{tpu_custom_call.1} parent=1 // pred_region
      %s27 = ssub.s32 16, 16
      %28 = vsyncadd [#allocation8], %s27
      %s30 = sshll.u32 %s0, 4
      %s31 = int_to_ptr.vmem [resolvable:$true] %s30
      %33 = dma.vmem_to_smem %s31, 16, [#allocation5], [#allocation8]
    $region5: #{tpu_custom_call.1} parent=1 // pred_fallthru
      _
    // Predicated region
    $region6: #{tpu_custom_call.1} parent=1 // pred_check
      _
    $region7: #{tpu_custom_call.1} parent=1 // pred_check_branch
      %35 = sbr.rel (0) target = $region9
    $region8: #{tpu_custom_call.1} parent=1 // pred_region
      %s37 = ssub.s32 16, 16
      %38 = vsyncadd [#allocation10], %s37
      %s40 = sshll.u32 %s1, 4
      %s41 = int_to_ptr.vmem [resolvable:$true] %s40
      %43 = dma.vmem_to_smem %s41, 16, [#allocation9], [#allocation10]
    $region9: #{tpu_custom_call.1} parent=1 // pred_fallthru
      _
    // Predicated region
    $region10: #{tpu_custom_call.1} parent=1 // pred_check
      _
    $region11: #{tpu_custom_call.1} parent=1 // pred_check_branch
      %45 = sbr.rel (0) target = $region13
    $region12: #{tpu_custom_call.1} parent=1 // pred_region
      _
    $region13: #{tpu_custom_call.1} parent=1 // pred_fallthru
      _
    // Predicated region
    $region14: #{tpu_custom_call.1} parent=1 // pred_check
      _
    $region15: #{tpu_custom_call.1} parent=1 // pred_check_branch
      %47 = sbr.rel (0) target = $region17
    $region16: #{tpu_custom_call.1} parent=1 // pred_region
      %s49 = ssub.s32 256, 256
      %50 = vsyncadd [#allocation6], %s49
      %s51 = sshll.u32 [#allocation11], 4
      %s52 = int_to_ptr.vmem [resolvable:$true] %s51
      %57 = dma.hbm_to_vmem [thread:$0]  %s3, 256, %s52, [#allocation6], 128, 128, 8
    $region17: #{tpu_custom_call.1} parent=1 // pred_fallthru
      _
    // Predicated region
    $region18: #{tpu_custom_call.1} parent=1 // pred_check
      _
    $region19: #{tpu_custom_call.1} parent=1 // pred_check_branch
      %59 = sbr.rel (0) target = $region21
    $region20: #{tpu_custom_call.1} parent=1 // pred_region
      %s61 = ssub.s32 128, 128
      %62 = vsyncadd [#allocation13], %s61
      %s64 = sshll.u32 [#allocation12], 4
      %s65 = int_to_ptr.vmem [resolvable:$true] %s64
      %67 = dma.hbm_to_vmem [thread:$0]  %s4, 128, %s65, [#allocation13]
    $region21: #{tpu_custom_call.1} parent=1 // pred_fallthru
      _
    // Predicated region
    $region22: #{tpu_custom_call.1} parent=1 // pred_check
      _
    $region23: #{tpu_custom_call.1} parent=1 // pred_check_branch
      %69 = sbr.rel (0) target = $region25
    $region24: #{tpu_custom_call.1} parent=1 // pred_region
      _
    $region25: #{tpu_custom_call.1} parent=1 // pred_fallthru
      _
    // Predicated region
    $region26: #{tpu_custom_call.1} parent=1 // pred_check
      _
    $region27: #{tpu_custom_call.1} parent=1 // pred_check_branch
      %71 = sbr.rel (0) target = $region29
    $region28: #{tpu_custom_call.1} parent=1 // pred_region
      _
    $region29: #{tpu_custom_call.1} parent=1 // pred_fallthru
      _
    // Predicated region
    $region30: #{tpu_custom_call.1} parent=1 // pred_check
      _
    $region31: #{tpu_custom_call.1} parent=1 // pred_check_branch
      %73 = sbr.rel (0) target = $region33
    $region32: #{tpu_custom_call.1} parent=1 // pred_region
      _
    $region33: #{tpu_custom_call.1} parent=1 // pred_fallthru
      _
    // Predicated region
    $region34: #{tpu_custom_call.1} parent=1 // pred_check
      _
    $region35: #{tpu_custom_call.1} parent=1 // pred_check_branch
      %75 = sbr.rel (0) target = $region37
    $region36: #{tpu_custom_call.1} parent=1 // pred_region
      _
    $region37: #{tpu_custom_call.1} parent=1 // pred_fallthru
      _
    // Predicated region
    $region38: #{tpu_custom_call.1} parent=1 // pred_check
      _
    $region39: #{tpu_custom_call.1} parent=1 // pred_check_branch
      %77 = sbr.rel (0) target = $region41
    $region40: #{tpu_custom_call.1} parent=1 // pred_region
      _
    $region41: #{tpu_custom_call.1} parent=1 // pred_fallthru
      _
    // Predicated region
    $region42: #{tpu_custom_call.1} parent=1 // pred_check
      _
    $region43: #{tpu_custom_call.1} parent=1 // pred_check_branch
      %79 = sbr.rel (0) target = $region45
    $region44: #{tpu_custom_call.1} parent=1 // pred_region
      _
    $region45: #{tpu_custom_call.1} parent=1 // pred_fallthru
      _
    // Predicated region
    $region46: #{tpu_custom_call.1} parent=1 // pred_check
      _
    $region47: #{tpu_custom_call.1} parent=1 // pred_check_branch
      %81 = sbr.rel (0) target = $region49
    $region48: #{tpu_custom_call.1} parent=1 // pred_region
      _
    $region49: #{tpu_custom_call.1} parent=1 // pred_fallthru
      _
    // Predicated region
    $region50: #{tpu_custom_call.1} parent=1 // pred_check
      _
    $region51: #{tpu_custom_call.1} parent=1 // pred_check_branch
      %83 = sbr.rel (0) target = $region53
    $region52: #{tpu_custom_call.1} parent=1 // pred_region
      _
    $region53: #{tpu_custom_call.1} parent=1 // pred_fallthru
      _
    // Predicated region
    $region54: #{tpu_custom_call.1} parent=1 // pred_check
      _
    $region55: #{tpu_custom_call.1} parent=1 // pred_check_branch
      %85 = sbr.rel (0) target = $region57
    $region56: #{tpu_custom_call.1} parent=1 // pred_region
      _
    $region57: #{tpu_custom_call.1} parent=1 // pred_fallthru
      _
    // Predicated region
    $region58: #{tpu_custom_call.1} parent=1 // pred_check
      _
    $region59: #{tpu_custom_call.1} parent=1 // pred_check_branch
      %87 = sbr.rel (0) target = $region61
    $region60: #{tpu_custom_call.1} parent=1 // pred_region
      %88 = dma.done [#allocation8], 16
    $region61: #{tpu_custom_call.1} parent=1 // pred_fallthru
      _
    // Predicated region
    $region62: #{tpu_custom_call.1} parent=1 // pred_check
      _
    $region63: #{tpu_custom_call.1} parent=1 // pred_check_branch
      %90 = sbr.rel (0) target = $region65
    $region64: #{tpu_custom_call.1} parent=1 // pred_region
      %91 = dma.done [#allocation10], 16
    $region65: #{tpu_custom_call.1} parent=1 // pred_fallthru
      _
    // Predicated region
    $region66: #{tpu_custom_call.1} parent=1 // pred_check
      _
    $region67: #{tpu_custom_call.1} parent=1 // pred_check_branch
      %93 = sbr.rel (0) target = $region69
    $region68: #{tpu_custom_call.1} parent=1 // pred_region
      %94 = dma.done [#allocation6], 256
    $region69: #{tpu_custom_call.1} parent=1 // pred_fallthru
      _
    // Predicated region
    $region70: #{tpu_custom_call.1} parent=1 // pred_check
      _
    $region71: #{tpu_custom_call.1} parent=1 // pred_check_branch
      %96 = sbr.rel (0) target = $region73
    $region72: #{tpu_custom_call.1} parent=1 // pred_region
      %97 = dma.done [#allocation13], 128
    $region73: #{tpu_custom_call.1} parent=1 // pred_fallthru
      _
    %98 = sfence
    %v99 = vld [vmem:[#allocation11] sm:$0xff]
    %v100 = vld [vmem:[#allocation11 + $0x8] sm:$0xff]
    %v101 = vld [vmem:[%s6] sm:$0xff]
    %v102 = vld [vmem:[%s6 + $0x8] sm:$0xff]
    %v103 = vld [vmem:[%s6 + $0x10] sm:$0xff]
    %v104 = vld [vmem:[%s6 + $0x18] sm:$0xff]
    %vm105 = vcmask 261120
    %v107 = vsel %vm105, %v99, 0
    %v110 = vsel %vm105, %v100, 0
    %112 = vmatprep.subr.mxu0 0.0
    %113 = vmatpush1.msra.mxu0 %v101
    %114 = vmatprep.subr.mxu0 0.0
    %115 = vmatpush1.msra.mxu0 %v102
    %116 = vmatprep.subr.mxu0 0.0
    %117 = vmatpush1.msra.mxu0 %v103
    %118 = vmatprep.subr.mxu0 0.0
    %119 = vmatpush1.msra.mxu0 %v104
    %120 = vmatprep.subr.mxu0 0.0
    %121 = vmatpush1.msra.mxu0 0.0
    %122 = vmatprep.subr.mxu0 0.0
    %123 = vmatpush1.msra.mxu0 0.0
    %124 = vmatprep.subr.mxu0 0.0
    %125 = vmatpush1.msra.mxu0 0.0
    %126 = vmatprep.subr.mxu0 0.0
    %127 = vmatpush1.msra.mxu0 0.0
    %128 = vmatprep.subr.mxu0 0.0
    %129 = vmatpush1.msra.mxu0 0.0
    %130 = vmatprep.subr.mxu0 0.0
    %131 = vmatpush1.msra.mxu0 0.0
    %132 = vmatprep.subr.mxu0 0.0
    %133 = vmatpush1.msra.mxu0 0.0
    %134 = vmatprep.subr.mxu0 0.0
    %135 = vmatpush1.msra.mxu0 0.0
    %136 = vmatprep.subr.mxu0 0.0
    %137 = vmatpush1.msra.mxu0 0.0
    %138 = vmatprep.subr.mxu0 0.0
    %139 = vmatpush1.msra.mxu0 0.0
    %140 = vmatprep.subr.mxu0 0.0
    %141 = vmatpush1.msra.mxu0 0.0
    %142 = vmatprep.subr.mxu0 0.0
    %143 = vmatpush1.msra.mxu0 0.0
    %144 = vmatprep.subr.mxu0 0.0
    %145 = vmatpush1.msra.mxu0 0.0
    %146 = vmatprep.subr.mxu0 0.0
    %147 = vmatpush1.msra.mxu0 0.0
    %148 = vmatprep.subr.mxu0 0.0
    %149 = vmatpush1.msra.mxu0 0.0
    %150 = vmatprep.subr.mxu0 0.0
    %151 = vmatpush1.msra.mxu0 0.0
    %152 = vmatprep.subr.mxu0 0.0
    %153 = vmatpush1.msra.mxu0 0.0
    %154 = vmatprep.subr.mxu0 0.0
    %155 = vmatpush1.msra.mxu0 0.0
    %156 = vmatprep.subr.mxu0 0.0
    %157 = vmatpush1.msra.mxu0 0.0
    %158 = vmatprep.subr.mxu0 0.0
    %159 = vmatpush1.msra.mxu0 0.0
    %160 = vmatprep.subr.mxu0 0.0
    %161 = vmatpush1.msra.mxu0 0.0
    %162 = vmatprep.subr.mxu0 0.0
    %163 = vmatpush1.msra.mxu0 0.0
    %164 = vmatprep.subr.mxu0 0.0
    %165 = vmatpush1.msra.mxu0 0.0
    %166 = vmatprep.subr.mxu0 0.0
    %167 = vmatpush1.msra.mxu0 0.0
    %168 = vmatprep.subr.mxu0 0.0
    %169 = vmatpush1.msra.mxu0 0.0
    %170 = vmatprep.subr.mxu0 0.0
    %171 = vmatpush1.msra.mxu0 0.0
    %172 = vmatprep.subr.mxu0 0.0
    %173 = vmatpush1.msra.mxu0 0.0
    %174 = vmatprep.subr.mxu0 0.0
    %175 = vmatpush1.msra.mxu0 0.0
    %176 = vmatprep.mubr.f32.mxu0 0.0
    %177 = vmatmul.mubr.f32.gmra.mrb[0].mxu0 %v107
    %v178 = vpop.f32.mrb[0].mxu0
    %v179 = vadd.f32 0.0, %v178
    %v180 = vpop.f32.mrb[0].mxu0
    %181 = vmatprep.mubr.f32.mxu0 0.0
    %182 = vmatmul.mubr.f32.gmra.mrb[0].mxu0 %v110
    %v183 = vpop.f32.mrb[0].mxu0
    %v184 = vadd.f32 0.0, %v183
    %v185 = vpop.f32.mrb[0].mxu0
    %186 = vdwg.mxu0
    %v187 = vmax.f32 %v179, 0.0
    %v188 = vmax.f32 %v184, 0.0
    %189 = vst.msk [vmem:[#allocation2] sm:$0xff] %vm105, %v187
    %190 = vst.msk [vmem:[#allocation2 + $0x8] sm:$0xff] %vm105, %v188
    loop: start=0, step=1, limit=2
    $region74: #{tpu_custom_call.1} parent=1 // loop_pre_header
      _
    $region75: #{tpu_custom_call.1} parent=1 // loop_header
      %s192 = sphi 0, %s196
      %p193 = scmp.ge.s32.totalorder %s192, 2
    $region76: #{tpu_custom_call.1} parent=1 // loop_header_branch
      %195 = sbr.rel (%p193) target = $region80
    $region77: #{tpu_custom_call.1} parent=1 // loop_body
      %v197 = vld [vmem:[#allocation2] sm:$0xff]
      %v198 = vld [vmem:[#allocation2 + $0x8] sm:$0xff]
      %v199 = vld [vmem:[#allocation12] sm:$0xff]
      %vm200 = vcmask 130048
      %v202 = vsel %vm200, %v199, 0
      %204 = vmatprep.subr.mxu0 0.0
      %205 = vmatpush1.msra.mxu0 %v197
      %206 = vmatprep.subr.mxu0 0.0
      %207 = vmatpush1.msra.mxu0 %v198
      %208 = vmatprep.subr.mxu0 0.0
      %209 = vmatpush1.msra.mxu0 0.0
      %210 = vmatprep.subr.mxu0 0.0
      %211 = vmatpush1.msra.mxu0 0.0
      %212 = vmatprep.subr.mxu0 0.0
      %213 = vmatpush1.msra.mxu0 0.0
      %214 = vmatprep.subr.mxu0 0.0
      %215 = vmatpush1.msra.mxu0 0.0
      %216 = vmatprep.subr.mxu0 0.0
      %217 = vmatpush1.msra.mxu0 0.0
      %218 = vmatprep.subr.mxu0 0.0
      %219 = vmatpush1.msra.mxu0 0.0
      %220 = vmatprep.subr.mxu0 0.0
      %221 = vmatpush1.msra.mxu0 0.0
      %222 = vmatprep.subr.mxu0 0.0
      %223 = vmatpush1.msra.mxu0 0.0
      %224 = vmatprep.subr.mxu0 0.0
      %225 = vmatpush1.msra.mxu0 0.0
      %226 = vmatprep.subr.mxu0 0.0
      %227 = vmatpush1.msra.mxu0 0.0
      %228 = vmatprep.subr.mxu0 0.0
      %229 = vmatpush1.msra.mxu0 0.0
      %230 = vmatprep.subr.mxu0 0.0
      %231 = vmatpush1.msra.mxu0 0.0
      %232 = vmatprep.subr.mxu0 0.0
      %233 = vmatpush1.msra.mxu0 0.0
      %234 = vmatprep.subr.mxu0 0.0
      %235 = vmatpush1.msra.mxu0 0.0
      %236 = vmatprep.subr.mxu0 0.0
      %237 = vmatpush1.msra.mxu0 0.0
      %238 = vmatprep.subr.mxu0 0.0
      %239 = vmatpush1.msra.mxu0 0.0
      %240 = vmatprep.subr.mxu0 0.0
      %241 = vmatpush1.msra.mxu0 0.0
      %242 = vmatprep.subr.mxu0 0.0
      %243 = vmatpush1.msra.mxu0 0.0
      %244 = vmatprep.subr.mxu0 0.0
      %245 = vmatpush1.msra.mxu0 0.0
      %246 = vmatprep.subr.mxu0 0.0
      %247 = vmatpush1.msra.mxu0 0.0
      %248 = vmatprep.subr.mxu0 0.0
      %249 = vmatpush1.msra.mxu0 0.0
      %250 = vmatprep.subr.mxu0 0.0
      %251 = vmatpush1.msra.mxu0 0.0
      %252 = vmatprep.subr.mxu0 0.0
      %253 = vmatpush1.msra.mxu0 0.0
      %254 = vmatprep.subr.mxu0 0.0
      %255 = vmatpush1.msra.mxu0 0.0
      %256 = vmatprep.subr.mxu0 0.0
      %257 = vmatpush1.msra.mxu0 0.0
      %258 = vmatprep.subr.mxu0 0.0
      %259 = vmatpush1.msra.mxu0 0.0
      %260 = vmatprep.subr.mxu0 0.0
      %261 = vmatpush1.msra.mxu0 0.0
      %262 = vmatprep.subr.mxu0 0.0
      %263 = vmatpush1.msra.mxu0 0.0
      %264 = vmatprep.subr.mxu0 0.0
      %265 = vmatpush1.msra.mxu0 0.0
      %266 = vmatprep.subr.mxu0 0.0
      %267 = vmatpush1.msra.mxu0 0.0
      %268 = vmatprep.mubr.f32.mxu0 0.0
      %269 = vmatmul.mubr.f32.gmra.mrb[0].mxu0 %v202
      %v270 = vpop.f32.mrb[0].mxu0
      %v271 = vadd.f32 0.0, %v270
      %v272 = vpop.f32.mrb[0].mxu0
      %273 = vdwg.mxu0
      %274 = vst.msk [vmem:[#allocation3] sm:$0xff] %vm105, %v271
      %s275 = sld [smem:[#allocation5]]
      %s276 = sld [smem:[#allocation9]]
      %s277 = scalar_lea.vmem [#allocation3], %s275
      %v278 = vld [vmem:[%s277] sm:$0x1]
      %s279 = scalar_lea.vmem [#allocation2], %s276
      %v280 = vld [vmem:[%s279] sm:$0x1]
      %v281 = vsub.f32 %v278, %v280
      %vm282 = vcmask 253952
      %283 = vst.msk [vmem:[#allocation4] sm:$0x1] %vm282, %v281
      %s284 = sld [smem:[#allocation5 + $0x1]]
      %s285 = sld [smem:[#allocation9 + $0x1]]
      %s286 = scalar_lea.vmem [#allocation3], %s284
      %v287 = vld [vmem:[%s286] sm:$0x1]
      %s288 = scalar_lea.vmem [#allocation2], %s285
      %v289 = vld [vmem:[%s288] sm:$0x1]
      %v290 = vsub.f32 %v287, %v289
      %291 = vst.msk [vmem:[#allocation4 + $0x1] sm:$0x1] %vm282, %v290
      %s292 = sld [smem:[#allocation5 + $0x2]]
      %s293 = sld [smem:[#allocation9 + $0x2]]
      %s294 = scalar_lea.vmem [#allocation3], %s292
      %v295 = vld [vmem:[%s294] sm:$0x1]
      %s296 = scalar_lea.vmem [#allocation2], %s293
      %v297 = vld [vmem:[%s296] sm:$0x1]
      %v298 = vsub.f32 %v295, %v297
      %299 = vst.msk [vmem:[#allocation4 + $0x2] sm:$0x1] %vm282, %v298
      %s300 = sld [smem:[#allocation5 + $0x3]]
      %s301 = sld [smem:[#allocation9 + $0x3]]
      %s302 = scalar_lea.vmem [#allocation3], %s300
      %v303 = vld [vmem:[%s302] sm:$0x1]
      %s304 = scalar_lea.vmem [#allocation2], %s301
      %v305 = vld [vmem:[%s304] sm:$0x1]
      %v306 = vsub.f32 %v303, %v305
      %307 = vst.msk [vmem:[#allocation4 + $0x3] sm:$0x1] %vm282, %v306
      %s308 = sld [smem:[#allocation5 + $0x4]]
      %s309 = sld [smem:[#allocation9 + $0x4]]
      %s310 = scalar_lea.vmem [#allocation3], %s308
      %v311 = vld [vmem:[%s310] sm:$0x1]
      %s312 = scalar_lea.vmem [#allocation2], %s309
      %v313 = vld [vmem:[%s312] sm:$0x1]
      %v314 = vsub.f32 %v311, %v313
      %315 = vst.msk [vmem:[#allocation4 + $0x4] sm:$0x1] %vm282, %v314
      %s316 = sld [smem:[#allocation5 + $0x5]]
      %s317 = sld [smem:[#allocation9 + $0x5]]
      %s318 = scalar_lea.vmem [#allocation3], %s316
      %v319 = vld [vmem:[%s318] sm:$0x1]
      %s320 = scalar_lea.vmem [#allocation2], %s317
      %v321 = vld [vmem:[%s320] sm:$0x1]
      %v322 = vsub.f32 %v319, %v321
      %323 = vst.msk [vmem:[#allocation4 + $0x5] sm:$0x1] %vm282, %v322
      %s324 = sld [smem:[#allocation5 + $0x6]]
      %s325 = sld [smem:[#allocation9 + $0x6]]
      %s326 = scalar_lea.vmem [#allocation3], %s324
      %v327 = vld [vmem:[%s326] sm:$0x1]
      %s328 = scalar_lea.vmem [#allocation2], %s325
      %v329 = vld [vmem:[%s328] sm:$0x1]
      %v330 = vsub.f32 %v327, %v329
      %331 = vst.msk [vmem:[#allocation4 + $0x6] sm:$0x1] %vm282, %v330
      %s332 = sld [smem:[#allocation5 + $0x7]]
      %s333 = sld [smem:[#allocation9 + $0x7]]
      %s334 = scalar_lea.vmem [#allocation3], %s332
      %v335 = vld [vmem:[%s334] sm:$0x1]
      %s336 = scalar_lea.vmem [#allocation2], %s333
      %v337 = vld [vmem:[%s336] sm:$0x1]
      %v338 = vsub.f32 %v335, %v337
      %339 = vst.msk [vmem:[#allocation4 + $0x7] sm:$0x1] %vm282, %v338
      %s340 = sld [smem:[#allocation5 + $0x8]]
      %s341 = sld [smem:[#allocation9 + $0x8]]
      %s342 = scalar_lea.vmem [#allocation3], %s340
      %v343 = vld [vmem:[%s342] sm:$0x1]
      %s344 = scalar_lea.vmem [#allocation2], %s341
      %v345 = vld [vmem:[%s344] sm:$0x1]
      %v346 = vsub.f32 %v343, %v345
      %347 = vst.msk [vmem:[#allocation4 + $0x8] sm:$0x1] %vm282, %v346
      %s348 = sld [smem:[#allocation5 + $0x9]]
      %s349 = sld [smem:[#allocation9 + $0x9]]
      %s350 = scalar_lea.vmem [#allocation3], %s348
      %v351 = vld [vmem:[%s350] sm:$0x1]
      %s352 = scalar_lea.vmem [#allocation2], %s349
      %v353 = vld [vmem:[%s352] sm:$0x1]
      %v354 = vsub.f32 %v351, %v353
      %355 = vst.msk [vmem:[#allocation4 + $0x9] sm:$0x1] %vm282, %v354
      %s356 = sld [smem:[#allocation5 + $0xa]]
      %s357 = sld [smem:[#allocation9 + $0xa]]
      %s358 = scalar_lea.vmem [#allocation3], %s356
      %v359 = vld [vmem:[%s358] sm:$0x1]
      %s360 = scalar_lea.vmem [#allocation2], %s357
      %v361 = vld [vmem:[%s360] sm:$0x1]
      %v362 = vsub.f32 %v359, %v361
      %363 = vst.msk [vmem:[#allocation4 + $0xa] sm:$0x1] %vm282, %v362
      %s364 = sld [smem:[#allocation5 + $0xb]]
      %s365 = sld [smem:[#allocation9 + $0xb]]
      %s366 = scalar_lea.vmem [#allocation3], %s364
      %v367 = vld [vmem:[%s366] sm:$0x1]
      %s368 = scalar_lea.vmem [#allocation2], %s365
      %v369 = vld [vmem:[%s368] sm:$0x1]
      %v370 = vsub.f32 %v367, %v369
      %371 = vst.msk [vmem:[#allocation4 + $0xb] sm:$0x1] %vm282, %v370
      %s372 = sld [smem:[#allocation5 + $0xc]]
      %s373 = sld [smem:[#allocation9 + $0xc]]
      %s374 = scalar_lea.vmem [#allocation3], %s372
      %v375 = vld [vmem:[%s374] sm:$0x1]
      %s376 = scalar_lea.vmem [#allocation2], %s373
      %v377 = vld [vmem:[%s376] sm:$0x1]
      %v378 = vsub.f32 %v375, %v377
      %379 = vst.msk [vmem:[#allocation4 + $0xc] sm:$0x1] %vm282, %v378
      %s380 = sld [smem:[#allocation5 + $0xd]]
      %s381 = sld [smem:[#allocation9 + $0xd]]
      %s382 = scalar_lea.vmem [#allocation3], %s380
      %v383 = vld [vmem:[%s382] sm:$0x1]
      %s384 = scalar_lea.vmem [#allocation2], %s381
      %v385 = vld [vmem:[%s384] sm:$0x1]
      %v386 = vsub.f32 %v383, %v385
      %387 = vst.msk [vmem:[#allocation4 + $0xd] sm:$0x1] %vm282, %v386
      %s388 = sld [smem:[#allocation5 + $0xe]]
      %s389 = sld [smem:[#allocation9 + $0xe]]
      %s390 = scalar_lea.vmem [#allocation3], %s388
      %v391 = vld [vmem:[%s390] sm:$0x1]
      %s392 = scalar_lea.vmem [#allocation2], %s389
      %v393 = vld [vmem:[%s392] sm:$0x1]
      %v394 = vsub.f32 %v391, %v393
      %395 = vst.msk [vmem:[#allocation4 + $0xe] sm:$0x1] %vm282, %v394
      %s396 = sld [smem:[#allocation5 + $0xf]]
      %s397 = sld [smem:[#allocation9 + $0xf]]
      %s398 = scalar_lea.vmem [#allocation3], %s396
      %v399 = vld [vmem:[%s398] sm:$0x1]
      %s400 = scalar_lea.vmem [#allocation2], %s397
      %v401 = vld [vmem:[%s400] sm:$0x1]
      %v402 = vsub.f32 %v399, %v401
      %403 = vst.msk [vmem:[#allocation4 + $0xf] sm:$0x1] %vm282, %v402
      %v404 = vld [vmem:[#allocation4] sm:$0xff]
      %v405 = vld [vmem:[#allocation4 + $0x8] sm:$0xff]
      %v406 = vld [vmem:[%s7] sm:$0xff]
      %v407 = vld [vmem:[%s7 + $0x8] sm:$0xff]
      %v408 = vld [vmem:[%s7 + $0x10] sm:$0xff]
      %v409 = vld [vmem:[%s7 + $0x18] sm:$0xff]
      %v411 = vsel %vm105, %v404, 0
      %v414 = vsel %vm105, %v405, 0
      %416 = vmatprep.subr.mxu0 0.0
      %417 = vmatpush1.msra.mxu0 %v406
      %418 = vmatprep.subr.mxu0 0.0
      %419 = vmatpush1.msra.mxu0 %v407
      %420 = vmatprep.subr.mxu0 0.0
      %421 = vmatpush1.msra.mxu0 %v408
      %422 = vmatprep.subr.mxu0 0.0
      %423 = vmatpush1.msra.mxu0 %v409
      %424 = vmatprep.subr.mxu0 0.0
      %425 = vmatpush1.msra.mxu0 0.0
      %426 = vmatprep.subr.mxu0 0.0
      %427 = vmatpush1.msra.mxu0 0.0
      %428 = vmatprep.subr.mxu0 0.0
      %429 = vmatpush1.msra.mxu0 0.0
      %430 = vmatprep.subr.mxu0 0.0
      %431 = vmatpush1.msra.mxu0 0.0
      %432 = vmatprep.subr.mxu0 0.0
      %433 = vmatpush1.msra.mxu0 0.0
      %434 = vmatprep.subr.mxu0 0.0
      %435 = vmatpush1.msra.mxu0 0.0
      %436 = vmatprep.subr.mxu0 0.0
      %437 = vmatpush1.msra.mxu0 0.0
      %438 = vmatprep.subr.mxu0 0.0
      %439 = vmatpush1.msra.mxu0 0.0
      %440 = vmatprep.subr.mxu0 0.0
      %441 = vmatpush1.msra.mxu0 0.0
      %442 = vmatprep.subr.mxu0 0.0
      %443 = vmatpush1.msra.mxu0 0.0
      %444 = vmatprep.subr.mxu0 0.0
      %445 = vmatpush1.msra.mxu0 0.0
      %446 = vmatprep.subr.mxu0 0.0
      %447 = vmatpush1.msra.mxu0 0.0
      %448 = vmatprep.subr.mxu0 0.0
      %449 = vmatpush1.msra.mxu0 0.0
      %450 = vmatprep.subr.mxu0 0.0
      %451 = vmatpush1.msra.mxu0 0.0
      %452 = vmatprep.subr.mxu0 0.0
      %453 = vmatpush1.msra.mxu0 0.0
      %454 = vmatprep.subr.mxu0 0.0
      %455 = vmatpush1.msra.mxu0 0.0
      %456 = vmatprep.subr.mxu0 0.0
      %457 = vmatpush1.msra.mxu0 0.0
      %458 = vmatprep.subr.mxu0 0.0
      %459 = vmatpush1.msra.mxu0 0.0
      %460 = vmatprep.subr.mxu0 0.0
      %461 = vmatpush1.msra.mxu0 0.0
      %462 = vmatprep.subr.mxu0 0.0
      %463 = vmatpush1.msra.mxu0 0.0
      %464 = vmatprep.subr.mxu0 0.0
      %465 = vmatpush1.msra.mxu0 0.0
      %466 = vmatprep.subr.mxu0 0.0
      %467 = vmatpush1.msra.mxu0 0.0
      %468 = vmatprep.subr.mxu0 0.0
      %469 = vmatpush1.msra.mxu0 0.0
      %470 = vmatprep.subr.mxu0 0.0
      %471 = vmatpush1.msra.mxu0 0.0
      %472 = vmatprep.subr.mxu0 0.0
      %473 = vmatpush1.msra.mxu0 0.0
      %474 = vmatprep.subr.mxu0 0.0
      %475 = vmatpush1.msra.mxu0 0.0
      %476 = vmatprep.subr.mxu0 0.0
      %477 = vmatpush1.msra.mxu0 0.0
      %478 = vmatprep.subr.mxu0 0.0
      %479 = vmatpush1.msra.mxu0 0.0
      %480 = vmatprep.mubr.f32.mxu0 0.0
      %481 = vmatmul.mubr.f32.gmra.mrb[0].mxu0 %v411
      %v482 = vpop.f32.mrb[0].mxu0
      %v483 = vadd.f32 0.0, %v482
      %v484 = vpop.f32.mrb[0].mxu0
      %485 = vmatprep.mubr.f32.mxu0 0.0
      %486 = vmatmul.mubr.f32.gmra.mrb[0].mxu0 %v414
      %v487 = vpop.f32.mrb[0].mxu0
      %v488 = vadd.f32 0.0, %v487
      %v489 = vpop.f32.mrb[0].mxu0
      %490 = vdwg.mxu0
      %v491 = vadd.f32 %v179, %v483
      %v492 = vadd.f32 %v184, %v488
      %v493 = vmax.f32 %v491, 0.0
      %v494 = vmax.f32 %v492, 0.0
      %495 = vst.msk [vmem:[#allocation2] sm:$0xff] %vm105, %v493
      %496 = vst.msk [vmem:[#allocation2 + $0x8] sm:$0xff] %vm105, %v494
    $region78: #{tpu_custom_call.1} parent=1 // loop_footer
      %s196 = sadd.s32 1, %s192
    $region79: #{tpu_custom_call.1} parent=1 // loop_footer_branch
      %191 = sbr.rel target = $region75
    $region80: #{tpu_custom_call.1} parent=1 // loop_exit
      _
    %v497 = vld [vmem:[#allocation12] sm:$0xff]
    %v498 = vld [vmem:[#allocation2] sm:$0xff]
    %v499 = vld [vmem:[#allocation2 + $0x8] sm:$0xff]
    %vm500 = vcmask 130048
    %v502 = vsel %vm500, %v497, 0
    %504 = vmatprep.subr.mxu0 0.0
    %505 = vmatpush1.msra.mxu0 %v498
    %506 = vmatprep.subr.mxu0 0.0
    %507 = vmatpush1.msra.mxu0 %v499
    %508 = vmatprep.subr.mxu0 0.0
    %509 = vmatpush1.msra.mxu0 0.0
    %510 = vmatprep.subr.mxu0 0.0
    %511 = vmatpush1.msra.mxu0 0.0
    %512 = vmatprep.subr.mxu0 0.0
    %513 = vmatpush1.msra.mxu0 0.0
    %514 = vmatprep.subr.mxu0 0.0
    %515 = vmatpush1.msra.mxu0 0.0
    %516 = vmatprep.subr.mxu0 0.0
    %517 = vmatpush1.msra.mxu0 0.0
    %518 = vmatprep.subr.mxu0 0.0
    %519 = vmatpush1.msra.mxu0 0.0
    %520 = vmatprep.subr.mxu0 0.0
    %521 = vmatpush1.msra.mxu0 0.0
    %522 = vmatprep.subr.mxu0 0.0
    %523 = vmatpush1.msra.mxu0 0.0
    %524 = vmatprep.subr.mxu0 0.0
    %525 = vmatpush1.msra.mxu0 0.0
    %526 = vmatprep.subr.mxu0 0.0
    %527 = vmatpush1.msra.mxu0 0.0
    %528 = vmatprep.subr.mxu0 0.0
    %529 = vmatpush1.msra.mxu0 0.0
    %530 = vmatprep.subr.mxu0 0.0
    %531 = vmatpush1.msra.mxu0 0.0
    %532 = vmatprep.subr.mxu0 0.0
    %533 = vmatpush1.msra.mxu0 0.0
    %534 = vmatprep.subr.mxu0 0.0
    %535 = vmatpush1.msra.mxu0 0.0
    %536 = vmatprep.subr.mxu0 0.0
    %537 = vmatpush1.msra.mxu0 0.0
    %538 = vmatprep.subr.mxu0 0.0
    %539 = vmatpush1.msra.mxu0 0.0
    %540 = vmatprep.subr.mxu0 0.0
    %541 = vmatpush1.msra.mxu0 0.0
    %542 = vmatprep.subr.mxu0 0.0
    %543 = vmatpush1.msra.mxu0 0.0
    %544 = vmatprep.subr.mxu0 0.0
    %545 = vmatpush1.msra.mxu0 0.0
    %546 = vmatprep.subr.mxu0 0.0
    %547 = vmatpush1.msra.mxu0 0.0
    %548 = vmatprep.subr.mxu0 0.0
    %549 = vmatpush1.msra.mxu0 0.0
    %550 = vmatprep.subr.mxu0 0.0
    %551 = vmatpush1.msra.mxu0 0.0
    %552 = vmatprep.subr.mxu0 0.0
    %553 = vmatpush1.msra.mxu0 0.0
    %554 = vmatprep.subr.mxu0 0.0
    %555 = vmatpush1.msra.mxu0 0.0
    %556 = vmatprep.subr.mxu0 0.0
    %557 = vmatpush1.msra.mxu0 0.0
    %558 = vmatprep.subr.mxu0 0.0
    %559 = vmatpush1.msra.mxu0 0.0
    %560 = vmatprep.subr.mxu0 0.0
    %561 = vmatpush1.msra.mxu0 0.0
    %562 = vmatprep.subr.mxu0 0.0
    %563 = vmatpush1.msra.mxu0 0.0
    %564 = vmatprep.subr.mxu0 0.0
    %565 = vmatpush1.msra.mxu0 0.0
    %566 = vmatprep.subr.mxu0 0.0
    %567 = vmatpush1.msra.mxu0 0.0
    %568 = vmatprep.mubr.f32.mxu0 0.0
    %569 = vmatmul.mubr.f32.gmra.mrb[0].mxu0 %v502
    %v570 = vpop.f32.mrb[0].mxu0
    %v571 = vadd.f32 0.0, %v570
    %v572 = vpop.f32.mrb[0].mxu0
    %573 = vdwg.mxu0
    %v574 = vld [vmem:[%s2] sm:$0xff]
    %v575 = vld [vmem:[%s8] sm:$0xff]
    %v576 = vld [vmem:[%s8 + $0x8] sm:$0xff]
    %v577 = vld [vmem:[%s8 + $0x10] sm:$0xff]
    %v578 = vld [vmem:[%s8 + $0x18] sm:$0xff]
    %v579 = vld [vmem:[%s8 + $0x20] sm:$0xff]
    %v580 = vld [vmem:[%s8 + $0x28] sm:$0xff]
    %v582 = vsel %vm105, %v571, 0
    %584 = vmatprep.subr.mxu0 0.0
    %585 = vmatpush1.msra.mxu0 %v577
    %586 = vmatprep.subr.mxu0 0.0
    %587 = vmatpush1.msra.mxu0 %v578
    %588 = vmatprep.subr.mxu0 0.0
    %589 = vmatpush1.msra.mxu0 %v579
    %590 = vmatprep.subr.mxu0 0.0
    %591 = vmatpush1.msra.mxu0 %v580
    %592 = vmatprep.subr.mxu0 0.0
    %593 = vmatpush1.msra.mxu0 0.0
    %594 = vmatprep.subr.mxu0 0.0
    %595 = vmatpush1.msra.mxu0 0.0
    %596 = vmatprep.subr.mxu0 0.0
    %597 = vmatpush1.msra.mxu0 0.0
    %598 = vmatprep.subr.mxu0 0.0
    %599 = vmatpush1.msra.mxu0 0.0
    %600 = vmatprep.subr.mxu0 0.0
    %601 = vmatpush1.msra.mxu0 0.0
    %602 = vmatprep.subr.mxu0 0.0
    %603 = vmatpush1.msra.mxu0 0.0
    %604 = vmatprep.subr.mxu0 0.0
    %605 = vmatpush1.msra.mxu0 0.0
    %606 = vmatprep.subr.mxu0 0.0
    %607 = vmatpush1.msra.mxu0 0.0
    %608 = vmatprep.subr.mxu0 0.0
    %609 = vmatpush1.msra.mxu0 0.0
    %610 = vmatprep.subr.mxu0 0.0
    %611 = vmatpush1.msra.mxu0 0.0
    %612 = vmatprep.subr.mxu0 0.0
    %613 = vmatpush1.msra.mxu0 0.0
    %614 = vmatprep.subr.mxu0 0.0
    %615 = vmatpush1.msra.mxu0 0.0
    %616 = vmatprep.subr.mxu0 0.0
    %617 = vmatpush1.msra.mxu0 0.0
    %618 = vmatprep.subr.mxu0 0.0
    %619 = vmatpush1.msra.mxu0 0.0
    %620 = vmatprep.subr.mxu0 0.0
    %621 = vmatpush1.msra.mxu0 0.0
    %622 = vmatprep.subr.mxu0 0.0
    %623 = vmatpush1.msra.mxu0 0.0
    %624 = vmatprep.subr.mxu0 0.0
    %625 = vmatpush1.msra.mxu0 0.0
    %626 = vmatprep.subr.mxu0 0.0
    %627 = vmatpush1.msra.mxu0 0.0
    %628 = vmatprep.subr.mxu0 0.0
    %629 = vmatpush1.msra.mxu0 0.0
    %630 = vmatprep.subr.mxu0 0.0
    %631 = vmatpush1.msra.mxu0 0.0
    %632 = vmatprep.subr.mxu0 0.0
    %633 = vmatpush1.msra.mxu0 0.0
    %634 = vmatprep.subr.mxu0 0.0
    %635 = vmatpush1.msra.mxu0 0.0
    %636 = vmatprep.subr.mxu0 0.0
    %637 = vmatpush1.msra.mxu0 0.0
    %638 = vmatprep.subr.mxu0 0.0
    %639 = vmatpush1.msra.mxu0 0.0
    %640 = vmatprep.subr.mxu0 0.0
    %641 = vmatpush1.msra.mxu0 0.0
    %642 = vmatprep.subr.mxu0 0.0
    %643 = vmatpush1.msra.mxu0 0.0
    %644 = vmatprep.subr.mxu0 0.0
    %645 = vmatpush1.msra.mxu0 0.0
    %646 = vmatprep.subr.mxu0 0.0
    %647 = vmatpush1.msra.mxu0 0.0
    %648 = vmatprep.mubr.f32.mxu0 0.0
    %649 = vmatmul.mubr.f32.gmra.mrb[0].mxu0 %v582
    %v650 = vpop.f32.mrb[0].mxu0
    %v651 = vadd.f32 0.0, %v650
    %v652 = vpop.f32.mrb[0].mxu0
    %653 = vdwg.mxu0
    %v655 = vsel %vm500, %v574, 0
    %657 = vmatprep.subr.mxu0 0.0
    %658 = vmatpush1.msra.mxu0 %v575
    %659 = vmatprep.subr.mxu0 0.0
    %660 = vmatpush1.msra.mxu0 %v576
    %661 = vmatprep.subr.mxu0 0.0
    %662 = vmatpush1.msra.mxu0 0.0
    %663 = vmatprep.subr.mxu0 0.0
    %664 = vmatpush1.msra.mxu0 0.0
    %665 = vmatprep.subr.mxu0 0.0
    %666 = vmatpush1.msra.mxu0 0.0
    %667 = vmatprep.subr.mxu0 0.0
    %668 = vmatpush1.msra.mxu0 0.0
    %669 = vmatprep.subr.mxu0 0.0
    %670 = vmatpush1.msra.mxu0 0.0
    %671 = vmatprep.subr.mxu0 0.0
    %672 = vmatpush1.msra.mxu0 0.0
    %673 = vmatprep.subr.mxu0 0.0
    %674 = vmatpush1.msra.mxu0 0.0
    %675 = vmatprep.subr.mxu0 0.0
    %676 = vmatpush1.msra.mxu0 0.0
    %677 = vmatprep.subr.mxu0 0.0
    %678 = vmatpush1.msra.mxu0 0.0
    %679 = vmatprep.subr.mxu0 0.0
    %680 = vmatpush1.msra.mxu0 0.0
    %681 = vmatprep.subr.mxu0 0.0
    %682 = vmatpush1.msra.mxu0 0.0
    %683 = vmatprep.subr.mxu0 0.0
    %684 = vmatpush1.msra.mxu0 0.0
    %685 = vmatprep.subr.mxu0 0.0
    %686 = vmatpush1.msra.mxu0 0.0
    %687 = vmatprep.subr.mxu0 0.0
    %688 = vmatpush1.msra.mxu0 0.0
    %689 = vmatprep.subr.mxu0 0.0
    %690 = vmatpush1.msra.mxu0 0.0
    %691 = vmatprep.subr.mxu0 0.0
    %692 = vmatpush1.msra.mxu0 0.0
    %693 = vmatprep.subr.mxu0 0.0
    %694 = vmatpush1.msra.mxu0 0.0
    %695 = vmatprep.subr.mxu0 0.0
    %696 = vmatpush1.msra.mxu0 0.0
    %697 = vmatprep.subr.mxu0 0.0
    %698 = vmatpush1.msra.mxu0 0.0
    %699 = vmatprep.subr.mxu0 0.0
    %700 = vmatpush1.msra.mxu0 0.0
    %701 = vmatprep.subr.mxu0 0.0
    %702 = vmatpush1.msra.mxu0 0.0
    %703 = vmatprep.subr.mxu0 0.0
    %704 = vmatpush1.msra.mxu0 0.0
    %705 = vmatprep.subr.mxu0 0.0
    %706 = vmatpush1.msra.mxu0 0.0
    %707 = vmatprep.subr.mxu0 0.0
    %708 = vmatpush1.msra.mxu0 0.0
    %709 = vmatprep.subr.mxu0 0.0
    %710 = vmatpush1.msra.mxu0 0.0
    %711 = vmatprep.subr.mxu0 0.0
    %712 = vmatpush1.msra.mxu0 0.0
    %713 = vmatprep.subr.mxu0 0.0
    %714 = vmatpush1.msra.mxu0 0.0
    %715 = vmatprep.subr.mxu0 0.0
    %716 = vmatpush1.msra.mxu0 0.0
    %717 = vmatprep.subr.mxu0 0.0
    %718 = vmatpush1.msra.mxu0 0.0
    %719 = vmatprep.subr.mxu0 0.0
    %720 = vmatpush1.msra.mxu0 0.0
    %721 = vmatprep.mubr.f32.mxu0 0.0
    %722 = vmatmul.mubr.f32.gmra.mrb[0].mxu0 %v655
    %v723 = vpop.f32.mrb[0].mxu0
    %v724 = vadd.f32 %v651, %v723
    %v725 = vpop.f32.mrb[0].mxu0
    %726 = vdwg.mxu0
    %v727 = vld [vmem:[%s9] sm:$0x1]
    %v729 = vlaneseq
    %v730 = vshrl.u32 %v729, 7
    %v731 = vsub.s32 0, %v730
    %v732 = vrot.slane %v727, %v731
    %v734 = vadd.f32 %v724, %v732
    %v735 = vmax.f32 %v734, 0.0
    %v736 = vld [vmem:[%s5] sm:$0x3]
    %vm737 = vcmask 64512
    %v739 = vsel %vm737, %v736, 0
    %741 = vmatprep.subr.mxu0 0.0
    %742 = vmatpush1.msra.mxu0 %v735
    %743 = vmatprep.subr.mxu0 0.0
    %744 = vmatpush1.msra.mxu0 0.0
    %745 = vmatprep.subr.mxu0 0.0
    %746 = vmatpush1.msra.mxu0 0.0
    %747 = vmatprep.subr.mxu0 0.0
    %748 = vmatpush1.msra.mxu0 0.0
    %749 = vmatprep.subr.mxu0 0.0
    %750 = vmatpush1.msra.mxu0 0.0
    %751 = vmatprep.subr.mxu0 0.0
    %752 = vmatpush1.msra.mxu0 0.0
    %753 = vmatprep.subr.mxu0 0.0
    %754 = vmatpush1.msra.mxu0 0.0
    %755 = vmatprep.subr.mxu0 0.0
    %756 = vmatpush1.msra.mxu0 0.0
    %757 = vmatprep.subr.mxu0 0.0
    %758 = vmatpush1.msra.mxu0 0.0
    %759 = vmatprep.subr.mxu0 0.0
    %760 = vmatpush1.msra.mxu0 0.0
    %761 = vmatprep.subr.mxu0 0.0
    %762 = vmatpush1.msra.mxu0 0.0
    %763 = vmatprep.subr.mxu0 0.0
    %764 = vmatpush1.msra.mxu0 0.0
    %765 = vmatprep.subr.mxu0 0.0
    %766 = vmatpush1.msra.mxu0 0.0
    %767 = vmatprep.subr.mxu0 0.0
    %768 = vmatpush1.msra.mxu0 0.0
    %769 = vmatprep.subr.mxu0 0.0
    %770 = vmatpush1.msra.mxu0 0.0
    %771 = vmatprep.subr.mxu0 0.0
    %772 = vmatpush1.msra.mxu0 0.0
    %773 = vmatprep.subr.mxu0 0.0
    %774 = vmatpush1.msra.mxu0 0.0
    %775 = vmatprep.subr.mxu0 0.0
    %776 = vmatpush1.msra.mxu0 0.0
    %777 = vmatprep.subr.mxu0 0.0
    %778 = vmatpush1.msra.mxu0 0.0
    %779 = vmatprep.subr.mxu0 0.0
    %780 = vmatpush1.msra.mxu0 0.0
    %781 = vmatprep.subr.mxu0 0.0
    %782 = vmatpush1.msra.mxu0 0.0
    %783 = vmatprep.subr.mxu0 0.0
    %784 = vmatpush1.msra.mxu0 0.0
    %785 = vmatprep.subr.mxu0 0.0
    %786 = vmatpush1.msra.mxu0 0.0
    %787 = vmatprep.subr.mxu0 0.0
    %788 = vmatpush1.msra.mxu0 0.0
    %789 = vmatprep.subr.mxu0 0.0
    %790 = vmatpush1.msra.mxu0 0.0
    %791 = vmatprep.subr.mxu0 0.0
    %792 = vmatpush1.msra.mxu0 0.0
    %793 = vmatprep.subr.mxu0 0.0
    %794 = vmatpush1.msra.mxu0 0.0
    %795 = vmatprep.subr.mxu0 0.0
    %796 = vmatpush1.msra.mxu0 0.0
    %797 = vmatprep.subr.mxu0 0.0
    %798 = vmatpush1.msra.mxu0 0.0
    %799 = vmatprep.subr.mxu0 0.0
    %800 = vmatpush1.msra.mxu0 0.0
    %801 = vmatprep.subr.mxu0 0.0
    %802 = vmatpush1.msra.mxu0 0.0
    %803 = vmatprep.subr.mxu0 0.0
    %804 = vmatpush1.msra.mxu0 0.0
    %805 = vmatprep.mubr.f32.mxu0 0.0
    %806 = vmatmul.mubr.f32.gmra.mrb[0].mxu0 %v739
    %v807 = vpop.f32.mrb[0].mxu0
    %v808 = vadd.f32 0.0, %v807
    %v809 = vpop.f32.mrb[0].mxu0
    %810 = vdwg.mxu0
    %v811 = vld [vmem:[%s10] sm:$0xff]
    %v812 = vld [vmem:[%s10 + $0x8] sm:$0xff]
    %v813 = vld [vmem:[%s10 + $0x10] sm:$0xff]
    %v814 = vld [vmem:[%s10 + $0x18] sm:$0xff]
    %v815 = vld [vmem:[%s11] sm:$0x1]
    %v817 = vlaneseq
    %v818 = vshrl.u32 %v817, 7
    %v819 = vsub.s32 0, %v818
    %v820 = vrot.slane %v815, %v819
    %v823 = vsel %vm105, %v808, 0
    %825 = vmatprep.subr.mxu0 0.0
    %826 = vmatpush1.msra.mxu0 %v811
    %827 = vmatprep.subr.mxu0 0.0
    %828 = vmatpush1.msra.mxu0 %v812
    %829 = vmatprep.subr.mxu0 0.0
    %830 = vmatpush1.msra.mxu0 %v813
    %831 = vmatprep.subr.mxu0 0.0
    %832 = vmatpush1.msra.mxu0 %v814
    %833 = vmatprep.subr.mxu0 0.0
    %834 = vmatpush1.msra.mxu0 0.0
    %835 = vmatprep.subr.mxu0 0.0
    %836 = vmatpush1.msra.mxu0 0.0
    %837 = vmatprep.subr.mxu0 0.0
    %838 = vmatpush1.msra.mxu0 0.0
    %839 = vmatprep.subr.mxu0 0.0
    %840 = vmatpush1.msra.mxu0 0.0
    %841 = vmatprep.subr.mxu0 0.0
    %842 = vmatpush1.msra.mxu0 0.0
    %843 = vmatprep.subr.mxu0 0.0
    %844 = vmatpush1.msra.mxu0 0.0
    %845 = vmatprep.subr.mxu0 0.0
    %846 = vmatpush1.msra.mxu0 0.0
    %847 = vmatprep.subr.mxu0 0.0
    %848 = vmatpush1.msra.mxu0 0.0
    %849 = vmatprep.subr.mxu0 0.0
    %850 = vmatpush1.msra.mxu0 0.0
    %851 = vmatprep.subr.mxu0 0.0
    %852 = vmatpush1.msra.mxu0 0.0
    %853 = vmatprep.subr.mxu0 0.0
    %854 = vmatpush1.msra.mxu0 0.0
    %855 = vmatprep.subr.mxu0 0.0
    %856 = vmatpush1.msra.mxu0 0.0
    %857 = vmatprep.subr.mxu0 0.0
    %858 = vmatpush1.msra.mxu0 0.0
    %859 = vmatprep.subr.mxu0 0.0
    %860 = vmatpush1.msra.mxu0 0.0
    %861 = vmatprep.subr.mxu0 0.0
    %862 = vmatpush1.msra.mxu0 0.0
    %863 = vmatprep.subr.mxu0 0.0
    %864 = vmatpush1.msra.mxu0 0.0
    %865 = vmatprep.subr.mxu0 0.0
    %866 = vmatpush1.msra.mxu0 0.0
    %867 = vmatprep.subr.mxu0 0.0
    %868 = vmatpush1.msra.mxu0 0.0
    %869 = vmatprep.subr.mxu0 0.0
    %870 = vmatpush1.msra.mxu0 0.0
    %871 = vmatprep.subr.mxu0 0.0
    %872 = vmatpush1.msra.mxu0 0.0
    %873 = vmatprep.subr.mxu0 0.0
    %874 = vmatpush1.msra.mxu0 0.0
    %875 = vmatprep.subr.mxu0 0.0
    %876 = vmatpush1.msra.mxu0 0.0
    %877 = vmatprep.subr.mxu0 0.0
    %878 = vmatpush1.msra.mxu0 0.0
    %879 = vmatprep.subr.mxu0 0.0
    %880 = vmatpush1.msra.mxu0 0.0
    %881 = vmatprep.subr.mxu0 0.0
    %882 = vmatpush1.msra.mxu0 0.0
    %883 = vmatprep.subr.mxu0 0.0
    %884 = vmatpush1.msra.mxu0 0.0
    %885 = vmatprep.subr.mxu0 0.0
    %886 = vmatpush1.msra.mxu0 0.0
    %887 = vmatprep.subr.mxu0 0.0
    %888 = vmatpush1.msra.mxu0 0.0
    %889 = vmatprep.mubr.f32.mxu0 0.0
    %890 = vmatmul.mubr.f32.gmra.mrb[0].mxu0 %v823
    %v891 = vpop.f32.mrb[0].mxu0
    %v892 = vadd.f32 %v820, %v891
    %v893 = vpop.f32.mrb[0].mxu0
    %894 = vdwg.mxu0
    %v895 = vmax.f32 %v892, 0.0
    %v896 = vld [vmem:[%s12] sm:$0xff]
    %v897 = vld [vmem:[%s12 + $0x8] sm:$0xff]
    %v898 = vld [vmem:[%s12 + $0x10] sm:$0xff]
    %v899 = vld [vmem:[%s12 + $0x18] sm:$0xff]
    %v900 = vld [vmem:[%s13] sm:$0x1]
    %v902 = vlaneseq
    %v903 = vshrl.u32 %v902, 7
    %v904 = vsub.s32 0, %v903
    %v905 = vrot.slane %v900, %v904
    %v908 = vsel %vm105, %v895, 0
    %910 = vmatprep.subr.mxu0 0.0
    %911 = vmatpush1.msra.mxu0 %v896
    %912 = vmatprep.subr.mxu0 0.0
    %913 = vmatpush1.msra.mxu0 %v897
    %914 = vmatprep.subr.mxu0 0.0
    %915 = vmatpush1.msra.mxu0 %v898
    %916 = vmatprep.subr.mxu0 0.0
    %917 = vmatpush1.msra.mxu0 %v899
    %918 = vmatprep.subr.mxu0 0.0
    %919 = vmatpush1.msra.mxu0 0.0
    %920 = vmatprep.subr.mxu0 0.0
    %921 = vmatpush1.msra.mxu0 0.0
    %922 = vmatprep.subr.mxu0 0.0
    %923 = vmatpush1.msra.mxu0 0.0
    %924 = vmatprep.subr.mxu0 0.0
    %925 = vmatpush1.msra.mxu0 0.0
    %926 = vmatprep.subr.mxu0 0.0
    %927 = vmatpush1.msra.mxu0 0.0
    %928 = vmatprep.subr.mxu0 0.0
    %929 = vmatpush1.msra.mxu0 0.0
    %930 = vmatprep.subr.mxu0 0.0
    %931 = vmatpush1.msra.mxu0 0.0
    %932 = vmatprep.subr.mxu0 0.0
    %933 = vmatpush1.msra.mxu0 0.0
    %934 = vmatprep.subr.mxu0 0.0
    %935 = vmatpush1.msra.mxu0 0.0
    %936 = vmatprep.subr.mxu0 0.0
    %937 = vmatpush1.msra.mxu0 0.0
    %938 = vmatprep.subr.mxu0 0.0
    %939 = vmatpush1.msra.mxu0 0.0
    %940 = vmatprep.subr.mxu0 0.0
    %941 = vmatpush1.msra.mxu0 0.0
    %942 = vmatprep.subr.mxu0 0.0
    %943 = vmatpush1.msra.mxu0 0.0
    %944 = vmatprep.subr.mxu0 0.0
    %945 = vmatpush1.msra.mxu0 0.0
    %946 = vmatprep.subr.mxu0 0.0
    %947 = vmatpush1.msra.mxu0 0.0
    %948 = vmatprep.subr.mxu0 0.0
    %949 = vmatpush1.msra.mxu0 0.0
    %950 = vmatprep.subr.mxu0 0.0
    %951 = vmatpush1.msra.mxu0 0.0
    %952 = vmatprep.subr.mxu0 0.0
    %953 = vmatpush1.msra.mxu0 0.0
    %954 = vmatprep.subr.mxu0 0.0
    %955 = vmatpush1.msra.mxu0 0.0
    %956 = vmatprep.subr.mxu0 0.0
    %957 = vmatpush1.msra.mxu0 0.0
    %958 = vmatprep.subr.mxu0 0.0
    %959 = vmatpush1.msra.mxu0 0.0
    %960 = vmatprep.subr.mxu0 0.0
    %961 = vmatpush1.msra.mxu0 0.0
    %962 = vmatprep.subr.mxu0 0.0
    %963 = vmatpush1.msra.mxu0 0.0
    %964 = vmatprep.subr.mxu0 0.0
    %965 = vmatpush1.msra.mxu0 0.0
    %966 = vmatprep.subr.mxu0 0.0
    %967 = vmatpush1.msra.mxu0 0.0
    %968 = vmatprep.subr.mxu0 0.0
    %969 = vmatpush1.msra.mxu0 0.0
    %970 = vmatprep.subr.mxu0 0.0
    %971 = vmatpush1.msra.mxu0 0.0
    %972 = vmatprep.subr.mxu0 0.0
    %973 = vmatpush1.msra.mxu0 0.0
    %974 = vmatprep.mubr.f32.mxu0 0.0
    %975 = vmatmul.mubr.f32.gmra.mrb[0].mxu0 %v908
    %v976 = vpop.f32.mrb[0].mxu0
    %v977 = vadd.f32 %v905, %v976
    %v978 = vpop.f32.mrb[0].mxu0
    %979 = vdwg.mxu0
    %v980 = vsub.f32 0.0, %v977
    %v981 = vmul.f32 %v980, 1.442695
    %v982 = vpow.pop %v981
    %v983 = vadd.f32 %v982, 1.0
    %v984 = vrcp.pop %v983
    %v985 = vmul.f32 1.0, %v984
    %vm986 = vcmask 17408
    %987 = vst.msk [vmem:[#allocation14] sm:$0x3] %vm986, %v985
    // Predicated region
    $region81: #{tpu_custom_call.1} parent=1 // pred_check
      _
    $region82: #{tpu_custom_call.1} parent=1 // pred_check_branch
      %989 = sbr.rel (0) target = $region84
    $region83: #{tpu_custom_call.1} parent=1 // pred_region
      %s991 = ssub.s32 32, 32
      %992 = vsyncadd [#allocation7], %s991
      %s994 = sshll.u32 [#allocation14], 4
      %s995 = int_to_ptr.vmem [resolvable:$true] %s994
      %997 = dma.vmem_to_hbm [thread:$0]  %s995, 32, %s14, [#allocation7]
    $region84: #{tpu_custom_call.1} parent=1 // pred_fallthru
      _
    // Predicated region
    $region85: #{tpu_custom_call.1} parent=1 // pred_check
      _
    $region86: #{tpu_custom_call.1} parent=1 // pred_check_branch
      %999 = sbr.rel (0) target = $region88
    $region87: #{tpu_custom_call.1} parent=1 // pred_region
      %1000 = dma.done [#allocation7], 32
    $region88: #{tpu_custom_call.1} parent=1 // pred_fallthru
      _
    %1001 = vsyncpa [#allocation6], 1
    %1002 = vsyncpa [#allocation13], 1
    %1003 = vsyncpa [#allocation7], 1
    %1004 = vsyncpa [#allocation8], 1
    %1005 = vsyncpa [#allocation10], 1

</llo_original>
